<compile_context>
chip_gen: v6e
topology: v6e:2x2x1
jax: 0.10.0
libtpu: 0.0.40
codegen_flags: <defaults>
</compile_context>

<pallas_src>
import jax
import jax.numpy as jnp
from jax.experimental import pallas as pl
from jax.experimental.pallas import tpu as pltpu


def _round_up(x, m):
    return ((x + m - 1) // m) * m


# ------------------------------------------------------------------ kernel 1: attention + GRU
def decode_step_kernel(
    emb_ref,        # [1, B, Ep]      bf16   (block over T)
    enc_ref,        # [B, S, EH2p]    bf16   (resident)
    hid0_ref,       # [B, Dhp]        f32    (resident)
    w_attn_h_ref,   # [Dhp, Dhp]      bf16
    w_attn_e_ref,   # [EH2p, Dhp]     bf16
    b_attn_ref,     # [1, Dhp]        f32
    v_ref,          # [1, Dhp]        f32
    w_ih_e_ref,     # [Ep, 3*Dhp]     bf16
    w_ih_c_ref,     # [EH2p, 3*Dhp]   bf16
    w_hh_ref,       # [Dhp, 3*Dhp]    bf16
    b_ih_ref,       # [1, 3*Dhp]      f32
    b_hh_ref,       # [1, 3*Dhp]      f32
    act_ref,        # out: [1, B, Kp] bf16   — [h_new | weighted | embedded]
    hid_out_ref,    # out: [B, Dhp]   f32    — final hidden (resident, written at last t)
    hid_sc,         # scratch VMEM [B, Dhp]    f32 — hidden carry
    ep_sc,          # scratch VMEM [B, S, Dhp] f32 — enc @ w_attn_e + b_attn (computed at t==0)
):
    t = pl.program_id(0)
    B, S, EH2p = enc_ref.shape
    Dhp = hid0_ref.shape[1]

    # One-time init: hidden carry + hidden-independent encoder projection (hoisted).
    @pl.when(t == 0)
    def _():
        hid_sc[...] = hid0_ref[...]
        enc2d = enc_ref[...].reshape(B * S, EH2p)
        ep = jnp.dot(enc2d, w_attn_e_ref[...], preferred_element_type=jnp.float32)
        ep_sc[...] = ep.reshape(B, S, Dhp) + b_attn_ref[...][None, :, :]

    hid = hid_sc[...]                                   # [B, Dhp] f32
    hid_b = hid.astype(jnp.bfloat16)
    emb = emb_ref[0]                                    # [B, Ep]  bf16
    enc = enc_ref[...]                                  # [B, S, EH2p] bf16

    # ---- attention: softmax(v . tanh(W_h h + (W_e enc + b))) --------------------------
    hp = jnp.dot(hid_b, w_attn_h_ref[...], preferred_element_type=jnp.float32)   # [B, Dhp]
    energy = jnp.tanh(ep_sc[...] + hp[:, None, :])                               # [B, S, Dhp] f32
    # N=1 projection as a lane reduce (VPU/XLU), not an MXU matmul:
    scores = jnp.sum(energy * v_ref[...][None, :, :], axis=-1)                   # [B, S]

    m = jnp.max(scores, axis=1, keepdims=True)
    e = jnp.exp(scores - m)
    inv = pl.reciprocal(jnp.sum(e, axis=1, keepdims=True), approx=True)
    a = (e * inv).astype(jnp.bfloat16)                                           # [B, S]

    # ---- weighted context: bf16 contraction over S, f32 accumulation ------------------
    weighted = jnp.einsum('bqs,bse->bqe', a[:, None, :], enc,
                          preferred_element_type=jnp.float32)[:, 0]              # [B, EH2p] f32
    w_b = weighted.astype(jnp.bfloat16)

    # ---- GRU cell (single step) --------------------------------------------------------
    gx = (jnp.dot(emb, w_ih_e_ref[...], preferred_element_type=jnp.float32)
          + jnp.dot(w_b, w_ih_c_ref[...], preferred_element_type=jnp.float32)
          + b_ih_ref[...])                                                       # [B, 3Dhp]
    gh = jnp.dot(hid_b, w_hh_ref[...], preferred_element_type=jnp.float32) + b_hh_ref[...]
    # Gate slices at lane-aligned offsets 0 / Dhp / 2Dhp (Dhp % 128 == 0).
    r = jax.nn.sigmoid(gx[:, :Dhp] + gh[:, :Dhp])
    z = jax.nn.sigmoid(gx[:, Dhp:2 * Dhp] + gh[:, Dhp:2 * Dhp])
    n = jnp.tanh(gx[:, 2 * Dhp:] + r * gh[:, 2 * Dhp:])
    h_new = (1.0 - z) * n + z * hid                                              # [B, Dhp] f32

    hid_sc[...] = h_new

    # Concatenated fc_out activation; all segment boundaries are multiples of 128.
    act_ref[0, :, :Dhp] = h_new.astype(jnp.bfloat16)
    act_ref[0, :, Dhp:Dhp + EH2p] = w_b
    act_ref[0, :, Dhp + EH2p:] = emb

    @pl.when(t == pl.num_programs(0) - 1)
    def _():
        hid_out_ref[...] = h_new


# ------------------------------------------------------------------ kernel 2: fused fc_out GEMM
def fc_out_kernel(act_ref, w_ref, b_ref, pred_ref):
    # act: [TM, Kp] bf16, w: [Kp, TN] bf16, b: [1, TN] f32, pred: [TM, TN] f32
    pred_ref[...] = (jnp.dot(act_ref[...], w_ref[...], preferred_element_type=jnp.float32)
                     + b_ref[...])


def _mosaic_params(dimension_semantics, vmem_bytes_needed):
    limit = None
    if vmem_bytes_needed > (28 << 20):
        # TODO(synk): on v7x prefer shrinking TN / m_tile over raising the scoped limit.
        limit = int(min(vmem_bytes_needed + (4 << 20), 100 << 20))
    return pltpu.CompilerParams(dimension_semantics=dimension_semantics,
                                vmem_limit_bytes=limit)


# ------------------------------------------------------------------ wrapper
def seq2seq_decode(params, trg_tokens, hidden0, encoder_outputs, *,
                   vocab_tile=512, m_tile=512):
    """Decode loop of Seq2Seq.forward (teacher forcing, eval mode).

    trg_tokens:       [T, B] int32
    hidden0:          [B, Dh] f32
    encoder_outputs:  [S, B, 2*Eh] f32 (PyTorch layout)
    returns: predictions [B, T, V], final hidden [B, Dh]
    """
    T, B = trg_tokens.shape
    S = encoder_outputs.shape[0]
    EH2 = encoder_outputs.shape[2]
    Dh = hidden0.shape[1]
    E = params["emb_table"].shape[1]
    V = params["w_out"].shape[1]

    Dhp = _round_up(Dh, 128)
    Ep = _round_up(E, 128)
    EH2p = _round_up(EH2, 128)
    Kp = Dhp + EH2p + Ep

    TN = min(_round_up(vocab_tile, 128), _round_up(V, 128))
    Vp = _round_up(V, TN)
    NV = Vp // TN

    M = T * B
    TM = min(_round_up(m_tile, 8), _round_up(M, 8))
    Mp = _round_up(M, TM)
    NM = Mp // TM

    bf, f32 = jnp.bfloat16, jnp.float32

    # ---- glue: embedding lookup + pad/layout/dtype plumbing ---------------------------
    emb_tab = jnp.pad(params["emb_table"], ((0, 0), (0, Ep - E))).astype(bf)
    emb_all = jnp.take(emb_tab, trg_tokens.reshape(-1), axis=0).reshape(T, B, Ep)

    enc = jnp.transpose(encoder_outputs, (1, 0, 2))
    enc = jnp.pad(enc, ((0, 0), (0, 0), (0, EH2p - EH2))).astype(bf)          # [B,S,EH2p]
    hid0 = jnp.pad(hidden0, ((0, 0), (0, Dhp - Dh))).astype(f32)

    # attention weights, pre-split (hidden rows / encoder rows)
    w_attn_h = jnp.pad(params["w_attn"][:Dh], ((0, Dhp - Dh), (0, Dhp - Dh))).astype(bf)
    w_attn_e = jnp.pad(params["w_attn"][Dh:], ((0, EH2p - EH2), (0, Dhp - Dh))).astype(bf)
    b_attn = jnp.pad(params["b_attn"], ((0, 0), (0, Dhp - Dh))).astype(f32)
    v_row = jnp.pad(params["v"].reshape(1, Dh), ((0, 0), (0, Dhp - Dh))).astype(f32)

    # GRU weights: split input block, pad each gate's columns to Dhp
    def gate_pad(w):  # [fin, 3*Dh] -> [fin, 3*Dhp]
        fin = w.shape[0]
        return jnp.pad(w.reshape(fin, 3, Dh), ((0, 0), (0, 0), (0, Dhp - Dh))).reshape(fin, 3 * Dhp)

    w_ih_e = jnp.pad(gate_pad(params["w_ih"][:E]), ((0, Ep - E), (0, 0))).astype(bf)
    w_ih_c = jnp.pad(gate_pad(params["w_ih"][E:]), ((0, EH2p - EH2), (0, 0))).astype(bf)
    w_hh = jnp.pad(gate_pad(params["w_hh"]), ((0, Dhp - Dh), (0, 0))).astype(bf)
    b_ih = gate_pad(params["b_ih"]).astype(f32)
    b_hh = gate_pad(params["b_hh"]).astype(f32)

    # fc_out weight re-assembled as ONE [Kp, Vp] matrix (segment boundaries 128-aligned)
    w_out_cat = jnp.concatenate([
        jnp.pad(params["w_out"][:Dh], ((0, Dhp - Dh), (0, Vp - V))),
        jnp.pad(params["w_out"][Dh:Dh + EH2], ((0, EH2p - EH2), (0, Vp - V))),
        jnp.pad(params["w_out"][Dh + EH2:], ((0, Ep - E), (0, Vp - V))),
    ], axis=0).astype(bf)                                                      # [Kp, Vp]
    b_out = jnp.pad(params["b_out"], ((0, 0), (0, Vp - V))).astype(f32)        # [1, Vp]

    # ------------------------------------------------------------------ kernel 1 call
    in_specs1 = [
        pl.BlockSpec((1, B, Ep), lambda t: (t, 0, 0)),       # embedded (per step)
        pl.BlockSpec((B, S, EH2p), lambda t: (0, 0, 0)),     # encoder outputs (resident)
        pl.BlockSpec((B, Dhp), lambda t: (0, 0)),            # initial hidden
        pl.BlockSpec((Dhp, Dhp), lambda t: (0, 0)),          # w_attn_h
        pl.BlockSpec((EH2p, Dhp), lambda t: (0, 0)),         # w_attn_e
        pl.BlockSpec((1, Dhp), lambda t: (0, 0)),            # b_attn
        pl.BlockSpec((1, Dhp), lambda t: (0, 0)),            # v
        pl.BlockSpec((Ep, 3 * Dhp), lambda t: (0, 0)),       # w_ih_e
        pl.BlockSpec((EH2p, 3 * Dhp), lambda t: (0, 0)),     # w_ih_c
        pl.BlockSpec((Dhp, 3 * Dhp), lambda t: (0, 0)),      # w_hh
        pl.BlockSpec((1, 3 * Dhp), lambda t: (0, 0)),        # b_ih
        pl.BlockSpec((1, 3 * Dhp), lambda t: (0, 0)),        # b_hh
    ]
    out_specs1 = (
        pl.BlockSpec((1, B, Kp), lambda t: (t, 0, 0)),       # fc_out activations per step
        pl.BlockSpec((B, Dhp), lambda t: (0, 0)),            # final hidden (resident)
    )
    out_shape1 = (
        jax.ShapeDtypeStruct((T, B, Kp), bf),
        jax.ShapeDtypeStruct((B, Dhp), f32),
    )
    scratch1 = [
        pltpu.VMEM((B, Dhp), f32),      # hidden carry
        pltpu.VMEM((B, S, Dhp), f32),   # hoisted encoder projection + bias
    ]

    flops1 = int(2 * B * S * EH2p * Dhp                                 # enc projection (once)
                 + T * (2 * B * Dhp * Dhp                                # W_h h
                        + 2 * B * S * EH2p                               # weighted context
                        + 2 * B * (Ep + EH2p + Dhp) * 3 * Dhp))          # GRU matmuls
    trans1 = int(T * B * (S * Dhp + S + 4 * Dhp))
    bytes1 = int(2 * (T * B * Ep + B * S * EH2p
                      + Dhp * Dhp + EH2p * Dhp + (Ep + EH2p + Dhp) * 3 * Dhp
                      + T * B * Kp)
                 + 4 * (2 * B * Dhp + 2 * Dhp + 6 * Dhp))
    vmem1 = int(2 * (B * Ep * 2 + B * S * EH2p * 2 + B * Dhp * 4
                     + Dhp * Dhp * 2 + EH2p * Dhp * 2 + 2 * Dhp * 4
                     + (Ep + EH2p + Dhp) * 3 * Dhp * 2 + 2 * 3 * Dhp * 4
                     + B * Kp * 2 + B * Dhp * 4)
                + B * Dhp * 4 + B * S * Dhp * 4)

    act_all, hid_p = pl.pallas_call(
        decode_step_kernel,
        grid_spec=pltpu.PrefetchScalarGridSpec(
            num_scalar_prefetch=0, grid=(T,),
            in_specs=in_specs1, out_specs=out_specs1, scratch_shapes=scratch1),
        out_shape=out_shape1,
        compiler_params=_mosaic_params(("arbitrary",), vmem1),
        cost_estimate=pl.CostEstimate(flops=flops1, transcendentals=trans1,
                                      bytes_accessed=bytes1),
    )(emb_all, enc, hid0, w_attn_h, w_attn_e, b_attn, v_row,
      w_ih_e, w_ih_c, w_hh, b_ih, b_hh)

    # ------------------------------------------------------------------ kernel 2 call
    act2d = act_all.reshape(M, Kp)
    if Mp > M:
        act2d = jnp.pad(act2d, ((0, Mp - M), (0, 0)))

    flops2 = int(2 * Mp * Kp * Vp)
    bytes2 = int(2 * (Kp * Vp + NV * Mp * Kp) + 4 * (Mp * Vp + Vp))
    vmem2 = int(2 * (TM * Kp * 2 + Kp * TN * 2 + TN * 4 + TM * TN * 4))

    pred_p = pl.pallas_call(
        fc_out_kernel,
        grid_spec=pltpu.PrefetchScalarGridSpec(
            num_scalar_prefetch=0,
            grid=(NV, NM),  # vocab axis outermost -> w_out streamed from HBM exactly once
            in_specs=[
                pl.BlockSpec((TM, Kp), lambda j, i: (i, 0)),   # activations
                pl.BlockSpec((Kp, TN), lambda j, i: (0, j)),   # fused w_out tile
                pl.BlockSpec((1, TN), lambda j, i: (0, j)),    # bias tile
            ],
            out_specs=pl.BlockSpec((TM, TN), lambda j, i: (i, j))),
        out_shape=jax.ShapeDtypeStruct((Mp, Vp), f32),
        compiler_params=_mosaic_params(("parallel", "parallel"), vmem2),
        cost_estimate=pl.CostEstimate(flops=flops2, transcendentals=0,
                                      bytes_accessed=bytes2),
    )(act2d, w_out_cat, b_out)

    preds = pred_p[:M, :V].reshape(T, B, V).transpose(1, 0, 2)   # [B, T, V] like Seq2Seq.forward
    return preds, hid_p[:, :Dh]


# ------------------------------------------------------------------ pure-JAX reference
def seq2seq_decode_ref(params, trg_tokens, hidden0, encoder_outputs):
    """Reference with the same bf16-weight / f32-accumulate numerics as the kernels."""
    bf = jnp.bfloat16
    Dh = hidden0.shape[1]
    E = params["emb_table"].shape[1]
    EH2 = encoder_outputs.shape[2]
    emb_tab = params["emb_table"].astype(bf)
    enc = jnp.transpose(encoder_outputs, (1, 0, 2)).astype(bf)
    B, S, _ = enc.shape
    w_attn_h = params["w_attn"][:Dh].astype(bf)
    w_attn_e = params["w_attn"][Dh:].astype(bf)
    b_attn = params["b_attn"]
    v_row = params["v"].reshape(-1)
    w_ih_e = params["w_ih"][:E].astype(bf)
    w_ih_c = params["w_ih"][E:].astype(bf)
    w_hh = params["w_hh"].astype(bf)
    b_ih, b_hh = params["b_ih"], params["b_hh"]
    w_out = params["w_out"].astype(bf)      # rows = [hidden | weighted | embedded]
    b_out = params["b_out"]

    ep_all = (jnp.dot(enc.reshape(B * S, EH2), w_attn_e,
                      preferred_element_type=jnp.float32).reshape(B, S, Dh)
              + b_attn[None, :, :])

    def step(hid, tok):
        emb = jnp.take(emb_tab, tok, axis=0)
        hid_b = hid.astype(bf)
        hp = jnp.dot(hid_b, w_attn_h, preferred_element_type=jnp.float32)
        energy = jnp.tanh(ep_all + hp[:, None, :])
        scores = jnp.sum(energy * v_row[None, None, :], axis=-1)
        a = jax.nn.softmax(scores, axis=1).astype(bf)
        weighted = jnp.einsum('bqs,bse->bqe', a[:, None, :], enc,
                              preferred_element_type=jnp.float32)[:, 0]
        w_b = weighted.astype(bf)
        gx = (jnp.dot(emb, w_ih_e, preferred_element_type=jnp.float32)
              + jnp.dot(w_b, w_ih_c, preferred_element_type=jnp.float32) + b_ih)
        gh = jnp.dot(hid_b, w_hh, preferred_element_type=jnp.float32) + b_hh
        r = jax.nn.sigmoid(gx[:, :Dh] + gh[:, :Dh])
        z = jax.nn.sigmoid(gx[:, Dh:2 * Dh] + gh[:, Dh:2 * Dh])
        n = jnp.tanh(gx[:, 2 * Dh:] + r * gh[:, 2 * Dh:])
        h_new = (1.0 - z) * n + z * hid
        act = jnp.concatenate([h_new.astype(bf), w_b, emb], axis=-1)
        pred = jnp.dot(act, w_out, preferred_element_type=jnp.float32) + b_out
        return h_new, pred

    h_final, preds = jax.lax.scan(step, hidden0, trg_tokens)
    return jnp.transpose(preds, (1, 0, 2)), h_final


# ------------------------------------------------------------------ params
def init_params(key, output_dim, emb_dim, enc_hid_dim, dec_hid_dim):
    EH2, Dh = 2 * enc_hid_dim, dec_hid_dim
    ks = jax.random.split(key, 10)
    s = 0.1
    return {
        "emb_table": s * jax.random.normal(ks[0], (output_dim, emb_dim), jnp.float32),
        # attention Linear(Dh + 2Eh -> Dh), x @ W layout, rows = [hidden | encoder]
        "w_attn": s * jax.random.normal(ks[1], (Dh + EH2, Dh), jnp.float32),
        "b_attn": s * jax.random.normal(ks[2], (1, Dh), jnp.float32),
        "v": s * jax.random.normal(ks[3], (Dh, 1), jnp.float32),
        # GRU: input = cat(embedded, weighted) -> rows [E | 2Eh], gate cols [r|z|n]
        "w_ih": s * jax.random.normal(ks[4], (emb_dim + EH2, 3 * Dh), jnp.float32),
        "w_hh": s * jax.random.normal(ks[5], (Dh, 3 * Dh), jnp.float32),
        "b_ih": s * jax.random.normal(ks[6], (1, 3 * Dh), jnp.float32),
        "b_hh": s * jax.random.normal(ks[7], (1, 3 * Dh), jnp.float32),
        # fc_out: cat(output, weighted, embedded) -> rows [Dh | 2Eh | E]
        "w_out": s * jax.random.normal(ks[8], (Dh + EH2 + emb_dim, output_dim), jnp.float32),
        "b_out": s * jax.random.normal(ks[9], (1, output_dim), jnp.float32),
    }


if __name__ == "__main__":
    output_dim, emb_dim, enc_hid_dim, dec_hid_dim = 16, 32, 16, 32
    B, S, T = 2, 8, 4

    key = jax.random.PRNGKey(0)
    k_p, k_tok, k_hid, k_enc = jax.random.split(key, 4)
    params = init_params(k_p, output_dim, emb_dim, enc_hid_dim, dec_hid_dim)

    trg = jax.random.randint(k_tok, (T, B), 0, output_dim, dtype=jnp.int32)
    hidden0 = 0.1 * jax.random.normal(k_hid, (B, dec_hid_dim), jnp.float32)
    encoder_outputs = 0.1 * jax.random.normal(k_enc, (S, B, 2 * enc_hid_dim), jnp.float32)

    preds, hid_final = seq2seq_decode(params, trg, hidden0, encoder_outputs)
    jax.block_until_ready((preds, hid_final))

    preds_r, hid_r = seq2seq_decode_ref(params, trg, hidden0, encoder_outputs)

    assert preds.shape == (B, T, output_dim)
    assert hid_final.shape == (B, dec_hid_dim)
    assert jnp.allclose(preds, preds_r, atol=2e-3), "prediction mismatch"
    assert jnp.allclose(hid_final, hid_r, atol=2e-3), "hidden mismatch"

    print("KERNEL_OK")
</pallas_src>

<mosaic_0001>
module attributes {stable_mosaic.version = 11 : i64} {
  func.func @decode_step_kernel(%arg0: i32, %arg1: memref<1x2x128xbf16, #tpu.memory_space<vmem>>, %arg2: memref<2x8x128xbf16, #tpu.memory_space<vmem>>, %arg3: memref<2x128xf32, #tpu.memory_space<vmem>>, %arg4: memref<128x128xbf16, #tpu.memory_space<vmem>>, %arg5: memref<128x128xbf16, #tpu.memory_space<vmem>>, %arg6: memref<1x128xf32, #tpu.memory_space<vmem>>, %arg7: memref<1x128xf32, #tpu.memory_space<vmem>>, %arg8: memref<128x384xbf16, #tpu.memory_space<vmem>>, %arg9: memref<128x384xbf16, #tpu.memory_space<vmem>>, %arg10: memref<128x384xbf16, #tpu.memory_space<vmem>>, %arg11: memref<1x384xf32, #tpu.memory_space<vmem>>, %arg12: memref<1x384xf32, #tpu.memory_space<vmem>>, %arg13: memref<1x2x384xbf16, #tpu.memory_space<vmem>>, %arg14: memref<2x128xf32, #tpu.memory_space<vmem>>, %arg15: memref<2x128xf32, #tpu.memory_space<vmem>>, %arg16: memref<2x8x128xf32, #tpu.memory_space<vmem>>) attributes {dimension_semantics = [#tpu.dimension_semantics<arbitrary>], iteration_bounds = array<i64: 4>, scalar_prefetch = 0 : i64, scratch_operands = 2 : i64, tpu.core_type = #tpu.core_type<tc>, window_params = [{transform_indices = @transform_0, window_bounds = array<i64: 1, 2, 128>}, {pipeline_mode = #tpu.pipeline_mode<synchronous>, transform_indices = @transform_1, window_bounds = array<i64: 2, 8, 128>}, {pipeline_mode = #tpu.pipeline_mode<synchronous>, transform_indices = @transform_2, window_bounds = array<i64: 2, 128>}, {pipeline_mode = #tpu.pipeline_mode<synchronous>, transform_indices = @transform_3, window_bounds = array<i64: 128, 128>}, {pipeline_mode = #tpu.pipeline_mode<synchronous>, transform_indices = @transform_4, window_bounds = array<i64: 128, 128>}, {pipeline_mode = #tpu.pipeline_mode<synchronous>, transform_indices = @transform_5, window_bounds = array<i64: 1, 128>}, {pipeline_mode = #tpu.pipeline_mode<synchronous>, transform_indices = @transform_6, window_bounds = array<i64: 1, 128>}, {pipeline_mode = #tpu.pipeline_mode<synchronous>, transform_indices = @transform_7, window_bounds = array<i64: 128, 384>}, {pipeline_mode = #tpu.pipeline_mode<synchronous>, transform_indices = @transform_8, window_bounds = array<i64: 128, 384>}, {pipeline_mode = #tpu.pipeline_mode<synchronous>, transform_indices = @transform_9, window_bounds = array<i64: 128, 384>}, {pipeline_mode = #tpu.pipeline_mode<synchronous>, transform_indices = @transform_10, window_bounds = array<i64: 1, 384>}, {pipeline_mode = #tpu.pipeline_mode<synchronous>, transform_indices = @transform_11, window_bounds = array<i64: 1, 384>}, {transform_indices = @transform_12, window_bounds = array<i64: 1, 2, 384>}, {pipeline_mode = #tpu.pipeline_mode<synchronous>, transform_indices = @transform_13, window_bounds = array<i64: 2, 128>}]} {
    %c0_i32 = arith.constant 0 : i32
    %0 = arith.cmpi eq, %arg0, %c0_i32 : i32
    %1 = arith.extui %0 : i1 to i32
    %c0_i32_0 = arith.constant 0 : i32
    %2 = arith.cmpi ne, %1, %c0_i32_0 : i32
    scf.if %2 {
      %c0_45 = arith.constant 0 : index
      %c0_46 = arith.constant 0 : index
      %88 = vector.load %arg3[%c0_45, %c0_46] : memref<2x128xf32, #tpu.memory_space<vmem>>, vector<2x128xf32>
      %c0_47 = arith.constant 0 : index
      %c0_48 = arith.constant 0 : index
      %89 = vector.load %arg15[%c0_47, %c0_48] : memref<2x128xf32, #tpu.memory_space<vmem>>, vector<2x128xf32>
      tpu.vector_store %arg15[%c0_47, %c0_48], %88 {strides = array<i32>} : memref<2x128xf32, #tpu.memory_space<vmem>>, vector<2x128xf32>,
      %c0_49 = arith.constant 0 : index
      %c0_50 = arith.constant 0 : index
      %c0_51 = arith.constant 0 : index
      %90 = vector.load %arg2[%c0_49, %c0_50, %c0_51] : memref<2x8x128xbf16, #tpu.memory_space<vmem>>, vector<2x8x128xbf16>
      %91 = vector.shape_cast %90 : vector<2x8x128xbf16> to vector<16x128xbf16>
      %c0_52 = arith.constant 0 : index
      %c0_53 = arith.constant 0 : index
      %92 = vector.load %arg5[%c0_52, %c0_53] : memref<128x128xbf16, #tpu.memory_space<vmem>>, vector<128x128xbf16>
      %cst_54 = arith.constant dense<0.000000e+00> : vector<16x128xf32>
      %93 = tpu.matmul %91, %92, %cst_54 {dimension_numbers = #tpu.dot_dimension_numbers<[1], [0], [0], [1], [0, 0, 1, 1], [], []>} : vector<16x128xbf16>, vector<128x128xbf16>, vector<16x128xf32> -> vector<16x128xf32>
      %94 = vector.shape_cast %93 : vector<16x128xf32> to vector<2x8x128xf32>
      %c0_55 = arith.constant 0 : index
      %c0_56 = arith.constant 0 : index
      %95 = vector.load %arg6[%c0_55, %c0_56] : memref<1x128xf32, #tpu.memory_space<vmem>>, vector<1x128xf32>
      %96 = vector.shape_cast %95 : vector<1x128xf32> to vector<1x1x128xf32>
      %97 = vector.broadcast %96 : vector<1x1x128xf32> to vector<2x8x128xf32>
      %98 = arith.addf %94, %97 : vector<2x8x128xf32>
      %c0_57 = arith.constant 0 : index
      %c0_58 = arith.constant 0 : index
      %c0_59 = arith.constant 0 : index
      %99 = vector.load %arg16[%c0_57, %c0_58, %c0_59] : memref<2x8x128xf32, #tpu.memory_space<vmem>>, vector<2x8x128xf32>
      tpu.vector_store %arg16[%c0_57, %c0_58, %c0_59], %98 {strides = array<i32>} : memref<2x8x128xf32, #tpu.memory_space<vmem>>, vector<2x8x128xf32>,
    } else {
    }
    %c0 = arith.constant 0 : index
    %c0_1 = arith.constant 0 : index
    %3 = vector.load %arg15[%c0, %c0_1] : memref<2x128xf32, #tpu.memory_space<vmem>>, vector<2x128xf32>
    %4 = arith.truncf %3 : vector<2x128xf32> to vector<2x128xbf16>
    %c0_2 = arith.constant 0 : index
    %c0_3 = arith.constant 0 : index
    %c0_4 = arith.constant 0 : index
    %5 = vector.load %arg1[%c0_2, %c0_3, %c0_4] : memref<1x2x128xbf16, #tpu.memory_space<vmem>>, vector<1x2x128xbf16>
    %6 = vector.shape_cast %5 : vector<1x2x128xbf16> to vector<2x128xbf16>
    %c0_5 = arith.constant 0 : index
    %c0_6 = arith.constant 0 : index
    %c0_7 = arith.constant 0 : index
    %7 = vector.load %arg2[%c0_5, %c0_6, %c0_7] : memref<2x8x128xbf16, #tpu.memory_space<vmem>>, vector<2x8x128xbf16>
    %c0_8 = arith.constant 0 : index
    %c0_9 = arith.constant 0 : index
    %8 = vector.load %arg4[%c0_8, %c0_9] : memref<128x128xbf16, #tpu.memory_space<vmem>>, vector<128x128xbf16>
    %cst = arith.constant dense<0.000000e+00> : vector<2x128xf32>
    %9 = tpu.matmul %4, %8, %cst {dimension_numbers = #tpu.dot_dimension_numbers<[1], [0], [0], [1], [0, 0, 1, 1], [], []>} : vector<2x128xbf16>, vector<128x128xbf16>, vector<2x128xf32> -> vector<2x128xf32>
    %c0_10 = arith.constant 0 : index
    %c0_11 = arith.constant 0 : index
    %c0_12 = arith.constant 0 : index
    %10 = vector.load %arg16[%c0_10, %c0_11, %c0_12] : memref<2x8x128xf32, #tpu.memory_space<vmem>>, vector<2x8x128xf32>
    %11 = vector.shape_cast %9 : vector<2x128xf32> to vector<2x1x128xf32>
    %12 = vector.broadcast %11 : vector<2x1x128xf32> to vector<2x8x128xf32>
    %13 = arith.addf %10, %12 : vector<2x8x128xf32>
    %14 = math.tanh %13 : vector<2x8x128xf32>
    %c0_13 = arith.constant 0 : index
    %c0_14 = arith.constant 0 : index
    %15 = vector.load %arg7[%c0_13, %c0_14] : memref<1x128xf32, #tpu.memory_space<vmem>>, vector<1x128xf32>
    %16 = vector.shape_cast %15 : vector<1x128xf32> to vector<1x1x128xf32>
    %17 = vector.broadcast %16 : vector<1x1x128xf32> to vector<2x8x128xf32>
    %18 = arith.mulf %14, %17 : vector<2x8x128xf32>
    %cst_15 = arith.constant dense<0.000000e+00> : vector<2x8xf32>
    %19 = vector.multi_reduction <add>, %18, %cst_15 [2] : vector<2x8x128xf32> to vector<2x8xf32>
    %cst_16 = arith.constant dense<0xFF800000> : vector<2xf32>
    %20 = vector.multi_reduction <maximumf>, %19, %cst_16 [1] : vector<2x8xf32> to vector<2xf32>
    %21 = vector.shape_cast %20 : vector<2xf32> to vector<2x1xf32>
    %22 = vector.broadcast %21 : vector<2x1xf32> to vector<2x8xf32>
    %23 = arith.subf %19, %22 : vector<2x8xf32>
    %24 = math.exp %23 : vector<2x8xf32>
    %cst_17 = arith.constant dense<0.000000e+00> : vector<2xf32>
    %25 = vector.multi_reduction <add>, %24, %cst_17 [1] : vector<2x8xf32> to vector<2xf32>
    %26 = vector.shape_cast %25 : vector<2xf32> to vector<2x1xf32>
    %27 = tpu.reciprocal %26 {approx = true} : vector<2x1xf32> -> vector<2x1xf32>
    %28 = vector.broadcast %27 : vector<2x1xf32> to vector<2x8xf32>
    %29 = arith.mulf %24, %28 : vector<2x8xf32>
    %30 = arith.truncf %29 : vector<2x8xf32> to vector<2x8xbf16>
    %31 = vector.shape_cast %30 : vector<2x8xbf16> to vector<2x1x8xbf16>
    "tpu.trace_start"() <{level = 10 : i32, message = "bqs,bse->bqe"}> : () -> ()
    %cst_18 = arith.constant dense<0.000000e+00> : vector<2x1x128xf32>
    %32 = tpu.matmul %31, %7, %cst_18 {dimension_numbers = #tpu.dot_dimension_numbers<[2], [1], [1], [2], [0, 0, 0, 1, 1, 2], [0], [0]>} : vector<2x1x8xbf16>, vector<2x8x128xbf16>, vector<2x1x128xf32> -> vector<2x1x128xf32>
    "tpu.trace_stop"() : () -> ()
    %33 = vector.shape_cast %32 : vector<2x1x128xf32> to vector<2x128xf32>
    %34 = arith.truncf %33 : vector<2x128xf32> to vector<2x128xbf16>
    %c0_19 = arith.constant 0 : index
    %c0_20 = arith.constant 0 : index
    %35 = vector.load %arg8[%c0_19, %c0_20] : memref<128x384xbf16, #tpu.memory_space<vmem>>, vector<128x384xbf16>
    %cst_21 = arith.constant dense<0.000000e+00> : vector<2x384xf32>
    %36 = tpu.matmul %6, %35, %cst_21 {dimension_numbers = #tpu.dot_dimension_numbers<[1], [0], [0], [1], [0, 0, 1, 1], [], []>} : vector<2x128xbf16>, vector<128x384xbf16>, vector<2x384xf32> -> vector<2x384xf32>
    %c0_22 = arith.constant 0 : index
    %c0_23 = arith.constant 0 : index
    %37 = vector.load %arg9[%c0_22, %c0_23] : memref<128x384xbf16, #tpu.memory_space<vmem>>, vector<128x384xbf16>
    %cst_24 = arith.constant dense<0.000000e+00> : vector<2x384xf32>
    %38 = tpu.matmul %34, %37, %cst_24 {dimension_numbers = #tpu.dot_dimension_numbers<[1], [0], [0], [1], [0, 0, 1, 1], [], []>} : vector<2x128xbf16>, vector<128x384xbf16>, vector<2x384xf32> -> vector<2x384xf32>
    %39 = arith.addf %36, %38 : vector<2x384xf32>
    %c0_25 = arith.constant 0 : index
    %c0_26 = arith.constant 0 : index
    %40 = vector.load %arg11[%c0_25, %c0_26] : memref<1x384xf32, #tpu.memory_space<vmem>>, vector<1x384xf32>
    %41 = vector.broadcast %40 : vector<1x384xf32> to vector<2x384xf32>
    %42 = arith.addf %39, %41 : vector<2x384xf32>
    %c0_27 = arith.constant 0 : index
    %c0_28 = arith.constant 0 : index
    %43 = vector.load %arg10[%c0_27, %c0_28] : memref<128x384xbf16, #tpu.memory_space<vmem>>, vector<128x384xbf16>
    %cst_29 = arith.constant dense<0.000000e+00> : vector<2x384xf32>
    %44 = tpu.matmul %4, %43, %cst_29 {dimension_numbers = #tpu.dot_dimension_numbers<[1], [0], [0], [1], [0, 0, 1, 1], [], []>} : vector<2x128xbf16>, vector<128x384xbf16>, vector<2x384xf32> -> vector<2x384xf32>
    %c0_30 = arith.constant 0 : index
    %c0_31 = arith.constant 0 : index
    %45 = vector.load %arg12[%c0_30, %c0_31] : memref<1x384xf32, #tpu.memory_space<vmem>>, vector<1x384xf32>
    %46 = vector.broadcast %45 : vector<1x384xf32> to vector<2x384xf32>
    %47 = arith.addf %44, %46 : vector<2x384xf32>
    %48 = vector.extract_strided_slice %42 {offsets = [0, 0], sizes = [2, 128], strides = [1, 1]} : vector<2x384xf32> to vector<2x128xf32>
    %49 = vector.extract_strided_slice %47 {offsets = [0, 0], sizes = [2, 128], strides = [1, 1]} : vector<2x384xf32> to vector<2x128xf32>
    %50 = arith.addf %48, %49 : vector<2x128xf32>
    %51 = arith.negf %50 : vector<2x128xf32>
    %52 = math.exp %51 : vector<2x128xf32>
    %cst_32 = arith.constant 1.000000e+00 : f32
    %53 = vector.broadcast %cst_32 : f32 to vector<2x128xf32>
    %54 = arith.addf %53, %52 : vector<2x128xf32>
    %55 = arith.divf %53, %54 : vector<2x128xf32>
    %56 = vector.extract_strided_slice %42 {offsets = [0, 128], sizes = [2, 128], strides = [1, 1]} : vector<2x384xf32> to vector<2x128xf32>
    %57 = vector.extract_strided_slice %47 {offsets = [0, 128], sizes = [2, 128], strides = [1, 1]} : vector<2x384xf32> to vector<2x128xf32>
    %58 = arith.addf %56, %57 : vector<2x128xf32>
    %59 = arith.negf %58 : vector<2x128xf32>
    %60 = math.exp %59 : vector<2x128xf32>
    %cst_33 = arith.constant 1.000000e+00 : f32
    %61 = vector.broadcast %cst_33 : f32 to vector<2x128xf32>
    %62 = arith.addf %61, %60 : vector<2x128xf32>
    %63 = arith.divf %61, %62 : vector<2x128xf32>
    %64 = vector.extract_strided_slice %42 {offsets = [0, 256], sizes = [2, 128], strides = [1, 1]} : vector<2x384xf32> to vector<2x128xf32>
    %65 = vector.extract_strided_slice %47 {offsets = [0, 256], sizes = [2, 128], strides = [1, 1]} : vector<2x384xf32> to vector<2x128xf32>
    %66 = arith.mulf %55, %65 : vector<2x128xf32>
    %67 = arith.addf %64, %66 : vector<2x128xf32>
    %68 = math.tanh %67 : vector<2x128xf32>
    %cst_34 = arith.constant 1.000000e+00 : f32
    %69 = vector.broadcast %cst_34 : f32 to vector<2x128xf32>
    %70 = arith.subf %69, %63 : vector<2x128xf32>
    %71 = arith.mulf %70, %68 : vector<2x128xf32>
    %72 = arith.mulf %63, %3 : vector<2x128xf32>
    %73 = arith.addf %71, %72 : vector<2x128xf32>
    %c0_35 = arith.constant 0 : index
    %c0_36 = arith.constant 0 : index
    %74 = vector.load %arg15[%c0_35, %c0_36] : memref<2x128xf32, #tpu.memory_space<vmem>>, vector<2x128xf32>
    tpu.vector_store %arg15[%c0_35, %c0_36], %73 {strides = array<i32>} : memref<2x128xf32, #tpu.memory_space<vmem>>, vector<2x128xf32>,
    %75 = arith.truncf %73 : vector<2x128xf32> to vector<2x128xbf16>
    %c0_37 = arith.constant 0 : index
    %c0_38 = arith.constant 0 : index
    %c0_39 = arith.constant 0 : index
    %76 = vector.load %arg13[%c0_37, %c0_38, %c0_39] : memref<1x2x384xbf16, #tpu.memory_space<vmem>>, vector<1x2x128xbf16>
    %77 = vector.shape_cast %76 : vector<1x2x128xbf16> to vector<2x128xbf16>
    %78 = vector.shape_cast %75 : vector<2x128xbf16> to vector<1x2x128xbf16>
    tpu.vector_store %arg13[%c0_37, %c0_38, %c0_39], %78 {strides = array<i32>} : memref<1x2x384xbf16, #tpu.memory_space<vmem>>, vector<1x2x128xbf16>,
    %c0_40 = arith.constant 0 : index
    %c0_41 = arith.constant 0 : index
    %c128 = arith.constant 128 : index
    %79 = vector.load %arg13[%c0_40, %c0_41, %c128] : memref<1x2x384xbf16, #tpu.memory_space<vmem>>, vector<1x2x128xbf16>
    %80 = vector.shape_cast %79 : vector<1x2x128xbf16> to vector<2x128xbf16>
    %81 = vector.shape_cast %34 : vector<2x128xbf16> to vector<1x2x128xbf16>
    tpu.vector_store %arg13[%c0_40, %c0_41, %c128], %81 {strides = array<i32>} : memref<1x2x384xbf16, #tpu.memory_space<vmem>>, vector<1x2x128xbf16>,
    %c0_42 = arith.constant 0 : index
    %c0_43 = arith.constant 0 : index
    %c256 = arith.constant 256 : index
    %82 = vector.load %arg13[%c0_42, %c0_43, %c256] : memref<1x2x384xbf16, #tpu.memory_space<vmem>>, vector<1x2x128xbf16>
    %83 = vector.shape_cast %82 : vector<1x2x128xbf16> to vector<2x128xbf16>
    %84 = vector.shape_cast %6 : vector<2x128xbf16> to vector<1x2x128xbf16>
    tpu.vector_store %arg13[%c0_42, %c0_43, %c256], %84 {strides = array<i32>} : memref<1x2x384xbf16, #tpu.memory_space<vmem>>, vector<1x2x128xbf16>,
    %c3_i32 = arith.constant 3 : i32
    %85 = arith.cmpi eq, %arg0, %c3_i32 : i32
    %86 = arith.extui %85 : i1 to i32
    %c0_i32_44 = arith.constant 0 : i32
    %87 = arith.cmpi ne, %86, %c0_i32_44 : i32
    scf.if %87 {
      %c0_45 = arith.constant 0 : index
      %c0_46 = arith.constant 0 : index
      %88 = vector.load %arg14[%c0_45, %c0_46] : memref<2x128xf32, #tpu.memory_space<vmem>>, vector<2x128xf32>
      tpu.vector_store %arg14[%c0_45, %c0_46], %73 {strides = array<i32>} : memref<2x128xf32, #tpu.memory_space<vmem>>, vector<2x128xf32>,
    } else {
    }
    return
  }
  func.func @transform_0(%arg0: i32) -> (i32, i32, i32) {
    %c0_i32 = arith.constant 0 : i32
    %c0_i32_0 = arith.constant 0 : i32
    %c0_i32_1 = arith.constant 0 : i32
    return %arg0, %c0_i32, %c0_i32_0 : i32, i32, i32
  }
  func.func @transform_1(%arg0: i32) -> (i32, i32, i32) {
    %c0_i32 = arith.constant 0 : i32
    %c0_i32_0 = arith.constant 0 : i32
    %c0_i32_1 = arith.constant 0 : i32
    %c0_i32_2 = arith.constant 0 : i32
    return %c0_i32, %c0_i32_0, %c0_i32_1 : i32, i32, i32
  }
  func.func @transform_2(%arg0: i32) -> (i32, i32) {
    %c0_i32 = arith.constant 0 : i32
    %c0_i32_0 = arith.constant 0 : i32
    %c0_i32_1 = arith.constant 0 : i32
    return %c0_i32, %c0_i32_0 : i32, i32
  }
  func.func @transform_3(%arg0: i32) -> (i32, i32) {
    %c0_i32 = arith.constant 0 : i32
    %c0_i32_0 = arith.constant 0 : i32
    %c0_i32_1 = arith.constant 0 : i32
    return %c0_i32, %c0_i32_0 : i32, i32
  }
  func.func @transform_4(%arg0: i32) -> (i32, i32) {
    %c0_i32 = arith.constant 0 : i32
    %c0_i32_0 = arith.constant 0 : i32
    %c0_i32_1 = arith.constant 0 : i32
    return %c0_i32, %c0_i32_0 : i32, i32
  }
  func.func @transform_5(%arg0: i32) -> (i32, i32) {
    %c0_i32 = arith.constant 0 : i32
    %c0_i32_0 = arith.constant 0 : i32
    %c0_i32_1 = arith.constant 0 : i32
    return %c0_i32, %c0_i32_0 : i32, i32
  }
  func.func @transform_6(%arg0: i32) -> (i32, i32) {
    %c0_i32 = arith.constant 0 : i32
    %c0_i32_0 = arith.constant 0 : i32
    %c0_i32_1 = arith.constant 0 : i32
    return %c0_i32, %c0_i32_0 : i32, i32
  }
  func.func @transform_7(%arg0: i32) -> (i32, i32) {
    %c0_i32 = arith.constant 0 : i32
    %c0_i32_0 = arith.constant 0 : i32
    %c0_i32_1 = arith.constant 0 : i32
    return %c0_i32, %c0_i32_0 : i32, i32
  }
  func.func @transform_8(%arg0: i32) -> (i32, i32) {
    %c0_i32 = arith.constant 0 : i32
    %c0_i32_0 = arith.constant 0 : i32
    %c0_i32_1 = arith.constant 0 : i32
    return %c0_i32, %c0_i32_0 : i32, i32
  }
  func.func @transform_9(%arg0: i32) -> (i32, i32) {
    %c0_i32 = arith.constant 0 : i32
    %c0_i32_0 = arith.constant 0 : i32
    %c0_i32_1 = arith.constant 0 : i32
    return %c0_i32, %c0_i32_0 : i32, i32
  }
  func.func @transform_10(%arg0: i32) -> (i32, i32) {
    %c0_i32 = arith.constant 0 : i32
    %c0_i32_0 = arith.constant 0 : i32
    %c0_i32_1 = arith.constant 0 : i32
    return %c0_i32, %c0_i32_0 : i32, i32
  }
  func.func @transform_11(%arg0: i32) -> (i32, i32) {
    %c0_i32 = arith.constant 0 : i32
    %c0_i32_0 = arith.constant 0 : i32
    %c0_i32_1 = arith.constant 0 : i32
    return %c0_i32, %c0_i32_0 : i32, i32
  }
  func.func @transform_12(%arg0: i32) -> (i32, i32, i32) {
    %c0_i32 = arith.constant 0 : i32
    %c0_i32_0 = arith.constant 0 : i32
    %c0_i32_1 = arith.constant 0 : i32
    return %arg0, %c0_i32, %c0_i32_0 : i32, i32, i32
  }
  func.func @transform_13(%arg0: i32) -> (i32, i32) {
    %c0_i32 = arith.constant 0 : i32
    %c0_i32_0 = arith.constant 0 : i32
    %c0_i32_1 = arith.constant 0 : i32
    return %c0_i32, %c0_i32_0 : i32, i32
  }
}

</mosaic_0001>

<llo_original>
// kernel: tpu_custom_call.1
$region0: #{tpu_custom_call.1}
  #allocation0 [shape = 'u32[]', space=smem, size = 0x4, offset = 0x4, fixed_abs, tag = 'smem constant byte address 0x4 - core index']
  #allocation1 [shape = 'u32[144,128]{1,0:T(1,128)}', space=vmem, size = 0x12000, scoped, tag = 'internal scratch']
  #allocation2 [shape = 'f32[2,128]{1,0:T(2,128)}', space=vmem, size = 0x400, scoped, tag = 'scratch operand']
  #allocation3 [shape = 'f32[2,8,128]{2,1,0:T(8,128)}', space=vmem, size = 0x2000, scoped, tag = 'scratch operand']
  %s0 = inlined_call_operand.hbm [shape: bf16[4,2,128], index: 0, kind: input, shape index: {}]
  %s1 = inlined_call_operand.hbm [shape: bf16[2,8,128], index: 1, kind: input, shape index: {}]
  %s2 = inlined_call_operand.hbm [shape: f32[2,128], index: 2, kind: input, shape index: {}]
  %s3 = inlined_call_operand.hbm [shape: bf16[128,128], index: 3, kind: input, shape index: {}]
  %s4 = inlined_call_operand.hbm [shape: bf16[128,128], index: 4, kind: input, shape index: {}]
  %s5 = inlined_call_operand.vmem [shape: f32[1,128], index: 5, kind: input, shape index: {}]
  %s6 = inlined_call_operand.vmem [shape: f32[1,128], index: 6, kind: input, shape index: {}]
  %s7 = inlined_call_operand.hbm [shape: bf16[128,384], index: 7, kind: input, shape index: {}]
  %s8 = inlined_call_operand.hbm [shape: bf16[128,384], index: 8, kind: input, shape index: {}]
  %s9 = inlined_call_operand.hbm [shape: bf16[128,384], index: 9, kind: input, shape index: {}]
  %s10 = inlined_call_operand.vmem [shape: f32[1,384], index: 10, kind: input, shape index: {}]
  %s11 = inlined_call_operand.vmem [shape: f32[1,384], index: 11, kind: input, shape index: {}]
  %s12 = inlined_call_operand.hbm [shape: bf16[4,2,384], index: 12, kind: output, shape index: {0}]
  %s13 = inlined_call_operand.hbm [shape: f32[2,128], index: 13, kind: output, shape index: {1}]
  %14 = xla_tuple %s12, %s13
  %s15 = sld [smem:[#allocation0]]
  $region129: #{tpu_custom_call.1} parent=0
    _
  %s17 = ssub.s32 1, %s15
  %s18 = scalar_select 0, %s17, %s15
  $region1: #{tpu_custom_call.1} parent=0
    #allocation4 [shape = 'u8[1024]{0}', space=vmem, size = 0x400, scoped, tag = 'input window, operand 0']
    #allocation5 [shape = 's32[2]{0}', space=sflag, size = 0x8, scoped, tag = 'scoped memory for tpu_custom_call.1']
    #allocation6 [shape = 's32[2]{0}', space=sflag, size = 0x8, scoped, tag = 'scoped memory for tpu_custom_call.1']
    #allocation7 [shape = 'u8[4096]{0}', space=vmem, size = 0x1000, scoped, tag = 'input window, operand 1, single buffered']
    #allocation8 [shape = 's32[1]{0}', space=sflag, size = 0x4, scoped, tag = 'scoped memory for tpu_custom_call.1']
    #allocation9 [shape = 'u8[1024]{0}', space=vmem, size = 0x400, scoped, tag = 'input window, operand 2, single buffered']
    #allocation10 [shape = 'u8[32768]{0}', space=vmem, size = 0x8000, scoped, tag = 'input window, operand 3, single buffered']
    #allocation11 [shape = 's32[1]{0}', space=sflag, size = 0x4, scoped, tag = 'scoped memory for tpu_custom_call.1']
    #allocation12 [shape = 'u8[32768]{0}', space=vmem, size = 0x8000, scoped, tag = 'input window, operand 4, single buffered']
    #allocation13 [shape = 'u8[98304]{0}', space=vmem, size = 0x18000, scoped, tag = 'input window, operand 7, single buffered']
    #allocation14 [shape = 's32[1]{0}', space=sflag, size = 0x4, scoped, tag = 'scoped memory for tpu_custom_call.1']
    #allocation15 [shape = 'u8[98304]{0}', space=vmem, size = 0x18000, scoped, tag = 'input window, operand 8, single buffered']
    #allocation16 [shape = 'u8[98304]{0}', space=vmem, size = 0x18000, scoped, tag = 'input window, operand 9, single buffered']
    #allocation17 [shape = 's32[1]{0}', space=sflag, size = 0x4, scoped, tag = 'scoped memory for tpu_custom_call.1']
    #allocation18 [shape = 'u8[3072]{0}', space=vmem, size = 0xc00, scoped, tag = 'output window, operand 0']
    #allocation19 [shape = 'u8[1024]{0}', space=vmem, size = 0x400, scoped, tag = 'output window, operand 1, single buffered']
    #allocation20 [shape = 's32[1]{0}', space=sflag, size = 0x4, scoped, tag = 'scoped memory for tpu_custom_call.1']
    %19 = vsyncpa [#allocation5], 0
    %s20 = scalar_lea.sflag [#allocation5], 1
    %21 = vsyncpa %s20, 0
    %22 = vsyncpa [#allocation8], 0
    %23 = vsyncpa [#allocation11], 0
    %24 = vsyncpa [#allocation14], 0
    %25 = vsyncpa [#allocation17], 0
    %26 = vsyncpa [#allocation6], 0
    %s27 = scalar_lea.sflag [#allocation6], 1
    %28 = vsyncpa %s27, 0
    %29 = vsyncpa [#allocation20], 0
    loop: start=0, step=1, limit=6
    $region2: #{tpu_custom_call.1} parent=1 // loop_pre_header
      _
    $region3: #{tpu_custom_call.1} parent=1 // loop_header
      %s31 = sphi 0, %s35
      %p32 = scmp.ge.s32.totalorder %s31, 6
      %s41 = sphi 0, %s43
      %s44 = sphi 0, %s41
      %s45 = sphi 0, %s44
      %s61 = sphi 0, %s45
      %s65 = sphi 0, %s65
      %s67 = sphi 0, %s65
      %s68 = sphi 0, %s67
      %s82 = sphi 0, %s68
      %s86 = sphi 0, %s86
      %s88 = sphi 0, %s86
      %s89 = sphi 0, %s88
      %s103 = sphi 0, %s89
      %s107 = sphi 0, %s107
      %s109 = sphi 0, %s107
      %s110 = sphi 0, %s109
      %s124 = sphi 0, %s110
      %s128 = sphi 0, %s128
      %s130 = sphi 0, %s128
      %s131 = sphi 0, %s130
      %s145 = sphi 0, %s131
      %s149 = sphi 0, %s149
      %s151 = sphi 0, %s149
      %s152 = sphi 0, %s151
      %s166 = sphi 0, %s152
      %s170 = sphi 0, %s170
      %s172 = sphi 0, %s170
      %s173 = sphi 0, %s172
      %s187 = sphi 0, %s173
      %s191 = sphi 0, %s191
      %s193 = sphi 0, %s191
      %s194 = sphi 0, %s193
      %s208 = sphi 0, %s194
      %s212 = sphi 0, %s212
      %s214 = sphi 0, %s212
      %s215 = sphi 0, %s214
      %s229 = sphi 0, %s215
      %s233 = sphi 0, %s233
      %s235 = sphi 0, %s233
      %s236 = sphi 0, %s235
      %s250 = sphi 0, %s236
      %s254 = sphi 0, %s254
      %s256 = sphi 0, %s254
      %s257 = sphi 0, %s256
      %s271 = sphi 0, %s257
      %s275 = sphi 0, %s275
      %s277 = sphi 0, %s275
      %s278 = sphi 0, %s277
      %s292 = sphi 0, %s278
      %s298 = sphi 0, %s300
      %s301 = sphi 0, %s298
      %s302 = sphi 0, %s301
      %s318 = sphi 0, %s302
      %s322 = sphi 0, %s322
      %s324 = sphi 0, %s322
      %s325 = sphi 0, %s324
      %s339 = sphi 0, %s325
    $region4: #{tpu_custom_call.1} parent=1 // loop_header_branch
      %34 = sbr.rel (%p32) target = $region8
    $region5: #{tpu_custom_call.1} parent=1 // loop_body
      %s36 = ssub.s32 %s31, 1
      %s37 = ssub.s32 %s31, 2
      %s38 = sadd.s32 %s31, 1
      %s39 = ssub.s32 %s31, %s38
      %p40 = scmp.eq.s32.totalorder %s39, 0
      %s42 = sadd.s32 %s41, 1
      %s43 = scalar_select %p40, %s41, %s42
      %p46 = pneg %p40
      %p47 = scmp.eq.s32.totalorder %s31, 3
      %p48 = por %p46, %p47
      %p49 = scmp.ne.s32.totalorder %s41, %s44
      %p50 = scmp.eq.s32.totalorder %s31, 0
      %p51 = por %p49, %p50
      %p52 = scmp.ne.s32.totalorder %s41, %s44
      %p53 = scmp.eq.s32.totalorder %s36, 3
      %p54 = por %p52, %p53
      %p55 = scmp.ne.s32.totalorder %s44, %s45
      %p56 = scmp.eq.s32.totalorder %s36, 0
      %p57 = por %p55, %p56
      %p58 = scmp.ne.s32.totalorder %s44, %s45
      %p59 = scmp.eq.s32.totalorder %s37, 3
      %p60 = por %p58, %p59
      %p62 = scmp.ne.s32.totalorder %s45, %s61
      %p63 = scmp.eq.s32.totalorder %s37, 0
      %p64 = por %p62, %p63
      %s66 = sadd.s32 %s65, 1
      %p69 = scmp.eq.s32.totalorder %s31, 3
      %p70 = scmp.ne.s32.totalorder %s65, %s67
      %p71 = scmp.eq.s32.totalorder %s31, 0
      %p72 = por %p70, %p71
      %p73 = scmp.ne.s32.totalorder %s65, %s67
      %p74 = scmp.eq.s32.totalorder %s36, 3
      %p75 = por %p73, %p74
      %p76 = scmp.ne.s32.totalorder %s67, %s68
      %p77 = scmp.eq.s32.totalorder %s36, 0
      %p78 = por %p76, %p77
      %p79 = scmp.ne.s32.totalorder %s67, %s68
      %p80 = scmp.eq.s32.totalorder %s37, 3
      %p81 = por %p79, %p80
      %p83 = scmp.ne.s32.totalorder %s68, %s82
      %p84 = scmp.eq.s32.totalorder %s37, 0
      %p85 = por %p83, %p84
      %s87 = sadd.s32 %s86, 1
      %p90 = scmp.eq.s32.totalorder %s31, 3
      %p91 = scmp.ne.s32.totalorder %s86, %s88
      %p92 = scmp.eq.s32.totalorder %s31, 0
      %p93 = por %p91, %p92
      %p94 = scmp.ne.s32.totalorder %s86, %s88
      %p95 = scmp.eq.s32.totalorder %s36, 3
      %p96 = por %p94, %p95
      %p97 = scmp.ne.s32.totalorder %s88, %s89
      %p98 = scmp.eq.s32.totalorder %s36, 0
      %p99 = por %p97, %p98
      %p100 = scmp.ne.s32.totalorder %s88, %s89
      %p101 = scmp.eq.s32.totalorder %s37, 3
      %p102 = por %p100, %p101
      %p104 = scmp.ne.s32.totalorder %s89, %s103
      %p105 = scmp.eq.s32.totalorder %s37, 0
      %p106 = por %p104, %p105
      %s108 = sadd.s32 %s107, 1
      %p111 = scmp.eq.s32.totalorder %s31, 3
      %p112 = scmp.ne.s32.totalorder %s107, %s109
      %p113 = scmp.eq.s32.totalorder %s31, 0
      %p114 = por %p112, %p113
      %p115 = scmp.ne.s32.totalorder %s107, %s109
      %p116 = scmp.eq.s32.totalorder %s36, 3
      %p117 = por %p115, %p116
      %p118 = scmp.ne.s32.totalorder %s109, %s110
      %p119 = scmp.eq.s32.totalorder %s36, 0
      %p120 = por %p118, %p119
      %p121 = scmp.ne.s32.totalorder %s109, %s110
      %p122 = scmp.eq.s32.totalorder %s37, 3
      %p123 = por %p121, %p122
      %p125 = scmp.ne.s32.totalorder %s110, %s124
      %p126 = scmp.eq.s32.totalorder %s37, 0
      %p127 = por %p125, %p126
      %s129 = sadd.s32 %s128, 1
      %p132 = scmp.eq.s32.totalorder %s31, 3
      %p133 = scmp.ne.s32.totalorder %s128, %s130
      %p134 = scmp.eq.s32.totalorder %s31, 0
      %p135 = por %p133, %p134
      %p136 = scmp.ne.s32.totalorder %s128, %s130
      %p137 = scmp.eq.s32.totalorder %s36, 3
      %p138 = por %p136, %p137
      %p139 = scmp.ne.s32.totalorder %s130, %s131
      %p140 = scmp.eq.s32.totalorder %s36, 0
      %p141 = por %p139, %p140
      %p142 = scmp.ne.s32.totalorder %s130, %s131
      %p143 = scmp.eq.s32.totalorder %s37, 3
      %p144 = por %p142, %p143
      %p146 = scmp.ne.s32.totalorder %s131, %s145
      %p147 = scmp.eq.s32.totalorder %s37, 0
      %p148 = por %p146, %p147
      %s150 = sadd.s32 %s149, 1
      %p153 = scmp.eq.s32.totalorder %s31, 3
      %p154 = scmp.ne.s32.totalorder %s149, %s151
      %p155 = scmp.eq.s32.totalorder %s31, 0
      %p156 = por %p154, %p155
      %p157 = scmp.ne.s32.totalorder %s149, %s151
      %p158 = scmp.eq.s32.totalorder %s36, 3
      %p159 = por %p157, %p158
      %p160 = scmp.ne.s32.totalorder %s151, %s152
      %p161 = scmp.eq.s32.totalorder %s36, 0
      %p162 = por %p160, %p161
      %p163 = scmp.ne.s32.totalorder %s151, %s152
      %p164 = scmp.eq.s32.totalorder %s37, 3
      %p165 = por %p163, %p164
      %p167 = scmp.ne.s32.totalorder %s152, %s166
      %p168 = scmp.eq.s32.totalorder %s37, 0
      %p169 = por %p167, %p168
      %s171 = sadd.s32 %s170, 1
      %p174 = scmp.eq.s32.totalorder %s31, 3
      %p175 = scmp.ne.s32.totalorder %s170, %s172
      %p176 = scmp.eq.s32.totalorder %s31, 0
      %p177 = por %p175, %p176
      %p178 = scmp.ne.s32.totalorder %s170, %s172
      %p179 = scmp.eq.s32.totalorder %s36, 3
      %p180 = por %p178, %p179
      %p181 = scmp.ne.s32.totalorder %s172, %s173
      %p182 = scmp.eq.s32.totalorder %s36, 0
      %p183 = por %p181, %p182
      %p184 = scmp.ne.s32.totalorder %s172, %s173
      %p185 = scmp.eq.s32.totalorder %s37, 3
      %p186 = por %p184, %p185
      %p188 = scmp.ne.s32.totalorder %s173, %s187
      %p189 = scmp.eq.s32.totalorder %s37, 0
      %p190 = por %p188, %p189
      %s192 = sadd.s32 %s191, 1
      %p195 = scmp.eq.s32.totalorder %s31, 3
      %p196 = scmp.ne.s32.totalorder %s191, %s193
      %p197 = scmp.eq.s32.totalorder %s31, 0
      %p198 = por %p196, %p197
      %p199 = scmp.ne.s32.totalorder %s191, %s193
      %p200 = scmp.eq.s32.totalorder %s36, 3
      %p201 = por %p199, %p200
      %p202 = scmp.ne.s32.totalorder %s193, %s194
      %p203 = scmp.eq.s32.totalorder %s36, 0
      %p204 = por %p202, %p203
      %p205 = scmp.ne.s32.totalorder %s193, %s194
      %p206 = scmp.eq.s32.totalorder %s37, 3
      %p207 = por %p205, %p206
      %p209 = scmp.ne.s32.totalorder %s194, %s208
      %p210 = scmp.eq.s32.totalorder %s37, 0
      %p211 = por %p209, %p210
      %s213 = sadd.s32 %s212, 1
      %p216 = scmp.eq.s32.totalorder %s31, 3
      %p217 = scmp.ne.s32.totalorder %s212, %s214
      %p218 = scmp.eq.s32.totalorder %s31, 0
      %p219 = por %p217, %p218
      %p220 = scmp.ne.s32.totalorder %s212, %s214
      %p221 = scmp.eq.s32.totalorder %s36, 3
      %p222 = por %p220, %p221
      %p223 = scmp.ne.s32.totalorder %s214, %s215
      %p224 = scmp.eq.s32.totalorder %s36, 0
      %p225 = por %p223, %p224
      %p226 = scmp.ne.s32.totalorder %s214, %s215
      %p227 = scmp.eq.s32.totalorder %s37, 3
      %p228 = por %p226, %p227
      %p230 = scmp.ne.s32.totalorder %s215, %s229
      %p231 = scmp.eq.s32.totalorder %s37, 0
      %p232 = por %p230, %p231
      %s234 = sadd.s32 %s233, 1
      %p237 = scmp.eq.s32.totalorder %s31, 3
      %p238 = scmp.ne.s32.totalorder %s233, %s235
      %p239 = scmp.eq.s32.totalorder %s31, 0
      %p240 = por %p238, %p239
      %p241 = scmp.ne.s32.totalorder %s233, %s235
      %p242 = scmp.eq.s32.totalorder %s36, 3
      %p243 = por %p241, %p242
      %p244 = scmp.ne.s32.totalorder %s235, %s236
      %p245 = scmp.eq.s32.totalorder %s36, 0
      %p246 = por %p244, %p245
      %p247 = scmp.ne.s32.totalorder %s235, %s236
      %p248 = scmp.eq.s32.totalorder %s37, 3
      %p249 = por %p247, %p248
      %p251 = scmp.ne.s32.totalorder %s236, %s250
      %p252 = scmp.eq.s32.totalorder %s37, 0
      %p253 = por %p251, %p252
      %s255 = sadd.s32 %s254, 1
      %p258 = scmp.eq.s32.totalorder %s31, 3
      %p259 = scmp.ne.s32.totalorder %s254, %s256
      %p260 = scmp.eq.s32.totalorder %s31, 0
      %p261 = por %p259, %p260
      %p262 = scmp.ne.s32.totalorder %s254, %s256
      %p263 = scmp.eq.s32.totalorder %s36, 3
      %p264 = por %p262, %p263
      %p265 = scmp.ne.s32.totalorder %s256, %s257
      %p266 = scmp.eq.s32.totalorder %s36, 0
      %p267 = por %p265, %p266
      %p268 = scmp.ne.s32.totalorder %s256, %s257
      %p269 = scmp.eq.s32.totalorder %s37, 3
      %p270 = por %p268, %p269
      %p272 = scmp.ne.s32.totalorder %s257, %s271
      %p273 = scmp.eq.s32.totalorder %s37, 0
      %p274 = por %p272, %p273
      %s276 = sadd.s32 %s275, 1
      %p279 = scmp.eq.s32.totalorder %s31, 3
      %p280 = scmp.ne.s32.totalorder %s275, %s277
      %p281 = scmp.eq.s32.totalorder %s31, 0
      %p282 = por %p280, %p281
      %p283 = scmp.ne.s32.totalorder %s275, %s277
      %p284 = scmp.eq.s32.totalorder %s36, 3
      %p285 = por %p283, %p284
      %p286 = scmp.ne.s32.totalorder %s277, %s278
      %p287 = scmp.eq.s32.totalorder %s36, 0
      %p288 = por %p286, %p287
      %p289 = scmp.ne.s32.totalorder %s277, %s278
      %p290 = scmp.eq.s32.totalorder %s37, 3
      %p291 = por %p289, %p290
      %p293 = scmp.ne.s32.totalorder %s278, %s292
      %p294 = scmp.eq.s32.totalorder %s37, 0
      %p295 = por %p293, %p294
      %s296 = ssub.s32 %s31, %s38
      %p297 = scmp.eq.s32.totalorder %s296, 0
      %s299 = sadd.s32 %s298, 1
      %s300 = scalar_select %p297, %s298, %s299
      %p303 = pneg %p297
      %p304 = scmp.eq.s32.totalorder %s31, 3
      %p305 = por %p303, %p304
      %p306 = scmp.ne.s32.totalorder %s298, %s301
      %p307 = scmp.eq.s32.totalorder %s31, 0
      %p308 = por %p306, %p307
      %p309 = scmp.ne.s32.totalorder %s298, %s301
      %p310 = scmp.eq.s32.totalorder %s36, 3
      %p311 = por %p309, %p310
      %p312 = scmp.ne.s32.totalorder %s301, %s302
      %p313 = scmp.eq.s32.totalorder %s36, 0
      %p314 = por %p312, %p313
      %p315 = scmp.ne.s32.totalorder %s301, %s302
      %p316 = scmp.eq.s32.totalorder %s37, 3
      %p317 = por %p315, %p316
      %p319 = scmp.ne.s32.totalorder %s302, %s318
      %p320 = scmp.eq.s32.totalorder %s37, 0
      %p321 = por %p319, %p320
      %s323 = sadd.s32 %s322, 1
      %p326 = scmp.eq.s32.totalorder %s31, 3
      %p327 = scmp.ne.s32.totalorder %s322, %s324
      %p328 = scmp.eq.s32.totalorder %s31, 0
      %p329 = por %p327, %p328
      %p330 = scmp.ne.s32.totalorder %s322, %s324
      %p331 = scmp.eq.s32.totalorder %s36, 3
      %p332 = por %p330, %p331
      %p333 = scmp.ne.s32.totalorder %s324, %s325
      %p334 = scmp.eq.s32.totalorder %s36, 0
      %p335 = por %p333, %p334
      %p336 = scmp.ne.s32.totalorder %s324, %s325
      %p337 = scmp.eq.s32.totalorder %s37, 3
      %p338 = por %p336, %p337
      %p340 = scmp.ne.s32.totalorder %s325, %s339
      %p341 = scmp.eq.s32.totalorder %s37, 0
      %p342 = por %p340, %p341
      %p343 = scmp.le.s32.totalorder 1, %s31
      %p344 = scmp.lt.s32.totalorder %s31, 5
      %p345 = pnand %p343, %p344
      %p346 = pneg %p345
      // Predicated region
      $region9: #{tpu_custom_call.1} parent=5 // pred_check
        _
      $region10: #{tpu_custom_call.1} parent=5 // pred_check_branch
        %348 = sbr.rel (%p345) target = $region12
      $region11: #{tpu_custom_call.1} parent=5 // pred_region
        %s349 = ssub.s32 %s31, 1
        // Predicated region
        $region13: #{tpu_custom_call.1} parent=11 // pred_check
          %p350 = pneg %p78
        $region14: #{tpu_custom_call.1} parent=11 // pred_check_branch
          %352 = sbr.rel (%p350) target = $region16
        $region15: #{tpu_custom_call.1} parent=11 // pred_region
          %s354 = ssub.s32 128, 128
          %355 = vsyncadd [#allocation8], %s354
          %s356 = sshll.u32 [#allocation7], 4
          %s357 = int_to_ptr.vmem [resolvable:$true] %s356
          %362 = dma.hbm_to_vmem [thread:$0]  %s1, 128, %s357, [#allocation8], 64, 64, 4
        $region16: #{tpu_custom_call.1} parent=11 // pred_fallthru
          _
        // Predicated region
        $region17: #{tpu_custom_call.1} parent=11 // pred_check
          %p363 = pneg %p99
        $region18: #{tpu_custom_call.1} parent=11 // pred_check_branch
          %365 = sbr.rel (%p363) target = $region20
        $region19: #{tpu_custom_call.1} parent=11 // pred_region
          %s367 = ssub.s32 32, 32
          %368 = vsyncadd [#allocation8], %s367
          %s370 = sshll.u32 [#allocation9], 4
          %s371 = int_to_ptr.vmem [resolvable:$true] %s370
          %373 = dma.hbm_to_vmem [thread:$0]  %s2, 32, %s371, [#allocation8]
        $region20: #{tpu_custom_call.1} parent=11 // pred_fallthru
          _
        // Predicated region
        $region21: #{tpu_custom_call.1} parent=11 // pred_check
          %p374 = pneg %p120
        $region22: #{tpu_custom_call.1} parent=11 // pred_check_branch
          %376 = sbr.rel (%p374) target = $region24
        $region23: #{tpu_custom_call.1} parent=11 // pred_region
          %s378 = ssub.s32 1024, 1024
          %379 = vsyncadd [#allocation11], %s378
          %s380 = sshll.u32 [#allocation10], 4
          %s381 = int_to_ptr.vmem [resolvable:$true] %s380
          %386 = dma.hbm_to_vmem [thread:$0]  %s3, 1024, %s381, [#allocation11], 64, 64, 4
        $region24: #{tpu_custom_call.1} parent=11 // pred_fallthru
          _
        // Predicated region
        $region25: #{tpu_custom_call.1} parent=11 // pred_check
          %p387 = pneg %p141
        $region26: #{tpu_custom_call.1} parent=11 // pred_check_branch
          %389 = sbr.rel (%p387) target = $region28
        $region27: #{tpu_custom_call.1} parent=11 // pred_region
          %s391 = ssub.s32 1024, 1024
          %392 = vsyncadd [#allocation11], %s391
          %s393 = sshll.u32 [#allocation12], 4
          %s394 = int_to_ptr.vmem [resolvable:$true] %s393
          %399 = dma.hbm_to_vmem [thread:$0]  %s4, 1024, %s394, [#allocation11], 64, 64, 4
        $region28: #{tpu_custom_call.1} parent=11 // pred_fallthru
          _
        // Predicated region
        $region29: #{tpu_custom_call.1} parent=11 // pred_check
          %p400 = pneg %p162
        $region30: #{tpu_custom_call.1} parent=11 // pred_check_branch
          %402 = sbr.rel (%p400) target = $region32
        $region31: #{tpu_custom_call.1} parent=11 // pred_region
          _
        $region32: #{tpu_custom_call.1} parent=11 // pred_fallthru
          _
        // Predicated region
        $region33: #{tpu_custom_call.1} parent=11 // pred_check
          %p403 = pneg %p183
        $region34: #{tpu_custom_call.1} parent=11 // pred_check_branch
          %405 = sbr.rel (%p403) target = $region36
        $region35: #{tpu_custom_call.1} parent=11 // pred_region
          _
        $region36: #{tpu_custom_call.1} parent=11 // pred_fallthru
          _
        // Predicated region
        $region37: #{tpu_custom_call.1} parent=11 // pred_check
          %p406 = pneg %p204
        $region38: #{tpu_custom_call.1} parent=11 // pred_check_branch
          %408 = sbr.rel (%p406) target = $region40
        $region39: #{tpu_custom_call.1} parent=11 // pred_region
          %s410 = ssub.s32 3072, 3072
          %411 = vsyncadd [#allocation14], %s410
          %s412 = sshll.u32 [#allocation13], 4
          %s413 = int_to_ptr.vmem [resolvable:$true] %s412
          %418 = dma.hbm_to_vmem [thread:$0]  %s7, 3072, %s413, [#allocation14], 192, 192, 12
        $region40: #{tpu_custom_call.1} parent=11 // pred_fallthru
          _
        // Predicated region
        $region41: #{tpu_custom_call.1} parent=11 // pred_check
          %p419 = pneg %p225
        $region42: #{tpu_custom_call.1} parent=11 // pred_check_branch
          %421 = sbr.rel (%p419) target = $region44
        $region43: #{tpu_custom_call.1} parent=11 // pred_region
          %s423 = ssub.s32 3072, 3072
          %424 = vsyncadd [#allocation14], %s423
          %s425 = sshll.u32 [#allocation15], 4
          %s426 = int_to_ptr.vmem [resolvable:$true] %s425
          %431 = dma.hbm_to_vmem [thread:$0]  %s8, 3072, %s426, [#allocation14], 192, 192, 12
        $region44: #{tpu_custom_call.1} parent=11 // pred_fallthru
          _
        // Predicated region
        $region45: #{tpu_custom_call.1} parent=11 // pred_check
          %p432 = pneg %p246
        $region46: #{tpu_custom_call.1} parent=11 // pred_check_branch
          %434 = sbr.rel (%p432) target = $region48
        $region47: #{tpu_custom_call.1} parent=11 // pred_region
          %s436 = ssub.s32 3072, 3072
          %437 = vsyncadd [#allocation17], %s436
          %s438 = sshll.u32 [#allocation16], 4
          %s439 = int_to_ptr.vmem [resolvable:$true] %s438
          %444 = dma.hbm_to_vmem [thread:$0]  %s9, 3072, %s439, [#allocation17], 192, 192, 12
        $region48: #{tpu_custom_call.1} parent=11 // pred_fallthru
          _
        // Predicated region
        $region49: #{tpu_custom_call.1} parent=11 // pred_check
          %p445 = pneg %p267
        $region50: #{tpu_custom_call.1} parent=11 // pred_check_branch
          %447 = sbr.rel (%p445) target = $region52
        $region51: #{tpu_custom_call.1} parent=11 // pred_region
          _
        $region52: #{tpu_custom_call.1} parent=11 // pred_fallthru
          _
        // Predicated region
        $region53: #{tpu_custom_call.1} parent=11 // pred_check
          %p448 = pneg %p288
        $region54: #{tpu_custom_call.1} parent=11 // pred_check_branch
          %450 = sbr.rel (%p448) target = $region56
        $region55: #{tpu_custom_call.1} parent=11 // pred_region
          _
        $region56: #{tpu_custom_call.1} parent=11 // pred_fallthru
          _
      $region12: #{tpu_custom_call.1} parent=5 // pred_fallthru
        _
      %p451 = scmp.lt.s32.totalorder %s31, 4
      // Predicated region
      $region57: #{tpu_custom_call.1} parent=5 // pred_check
        %p452 = pneg %p451
      $region58: #{tpu_custom_call.1} parent=5 // pred_check_branch
        %454 = sbr.rel (%p452) target = $region60
      $region59: #{tpu_custom_call.1} parent=5 // pred_region
        // Predicated region
        $region61: #{tpu_custom_call.1} parent=59 // pred_check
          %p455 = pneg %p51
        $region62: #{tpu_custom_call.1} parent=59 // pred_check_branch
          %457 = sbr.rel (%p455) target = $region64
        $region63: #{tpu_custom_call.1} parent=59 // pred_region
          %s458 = sand.u32 %s41, 1
          %s459 = scalar_lea.sflag [#allocation5], %s458
          %s460 = sand.u32 %s41, 1
          %s461 = scalar_lea.vmem [#allocation4], %s460
          %s463 = ssub.s32 16, 16
          %464 = vsyncadd %s459, %s463
          %s465 = smul.addr %s31, 16
          %s466 = scalar_lea.hbm %s0, %s465
          %s468 = sshll.u32 %s461, 4
          %s469 = int_to_ptr.vmem [resolvable:$true] %s468
          %471 = dma.hbm_to_vmem [thread:$0]  %s466, 16, %s469, %s459
        $region64: #{tpu_custom_call.1} parent=59 // pred_fallthru
          _
      $region60: #{tpu_custom_call.1} parent=5 // pred_fallthru
        _
      %p472 = scmp.le.s32.totalorder 1, %s31
      %p473 = scmp.lt.s32.totalorder %s31, 5
      %p474 = pnand %p472, %p473
      %p475 = pneg %p474
      // Predicated region
      $region65: #{tpu_custom_call.1} parent=5 // pred_check
        _
      $region66: #{tpu_custom_call.1} parent=5 // pred_check_branch
        %477 = sbr.rel (%p474) target = $region68
      $region67: #{tpu_custom_call.1} parent=5 // pred_region
        %s478 = ssub.s32 %s31, 1
        %s479 = sand.u32 %s44, 1
        %s480 = scalar_lea.sflag [#allocation5], %s479
        %s481 = sand.u32 %s44, 1
        %s482 = scalar_lea.vmem [#allocation4], %s481
        // Predicated region
        $region69: #{tpu_custom_call.1} parent=67 // pred_check
          %p483 = pneg %p57
        $region70: #{tpu_custom_call.1} parent=67 // pred_check_branch
          %485 = sbr.rel (%p483) target = $region72
        $region71: #{tpu_custom_call.1} parent=67 // pred_region
          %486 = dma.done %s480, 16
        $region72: #{tpu_custom_call.1} parent=67 // pred_fallthru
          _
        // Predicated region
        $region73: #{tpu_custom_call.1} parent=67 // pred_check
          %p487 = pneg %p78
        $region74: #{tpu_custom_call.1} parent=67 // pred_check_branch
          %489 = sbr.rel (%p487) target = $region76
        $region75: #{tpu_custom_call.1} parent=67 // pred_region
          %490 = dma.done [#allocation8], 128
        $region76: #{tpu_custom_call.1} parent=67 // pred_fallthru
          _
        // Predicated region
        $region77: #{tpu_custom_call.1} parent=67 // pred_check
          %p491 = pneg %p99
        $region78: #{tpu_custom_call.1} parent=67 // pred_check_branch
          %493 = sbr.rel (%p491) target = $region80
        $region79: #{tpu_custom_call.1} parent=67 // pred_region
          %494 = dma.done [#allocation8], 32
        $region80: #{tpu_custom_call.1} parent=67 // pred_fallthru
          _
        // Predicated region
        $region81: #{tpu_custom_call.1} parent=67 // pred_check
          %p495 = pneg %p120
        $region82: #{tpu_custom_call.1} parent=67 // pred_check_branch
          %497 = sbr.rel (%p495) target = $region84
        $region83: #{tpu_custom_call.1} parent=67 // pred_region
          %498 = dma.done [#allocation11], 1024
        $region84: #{tpu_custom_call.1} parent=67 // pred_fallthru
          _
        // Predicated region
        $region85: #{tpu_custom_call.1} parent=67 // pred_check
          %p499 = pneg %p141
        $region86: #{tpu_custom_call.1} parent=67 // pred_check_branch
          %501 = sbr.rel (%p499) target = $region88
        $region87: #{tpu_custom_call.1} parent=67 // pred_region
          %502 = dma.done [#allocation11], 1024
        $region88: #{tpu_custom_call.1} parent=67 // pred_fallthru
          _
        // Predicated region
        $region89: #{tpu_custom_call.1} parent=67 // pred_check
          %p503 = pneg %p204
        $region90: #{tpu_custom_call.1} parent=67 // pred_check_branch
          %505 = sbr.rel (%p503) target = $region92
        $region91: #{tpu_custom_call.1} parent=67 // pred_region
          %506 = dma.done [#allocation14], 3072
        $region92: #{tpu_custom_call.1} parent=67 // pred_fallthru
          _
        // Predicated region
        $region93: #{tpu_custom_call.1} parent=67 // pred_check
          %p507 = pneg %p225
        $region94: #{tpu_custom_call.1} parent=67 // pred_check_branch
          %509 = sbr.rel (%p507) target = $region96
        $region95: #{tpu_custom_call.1} parent=67 // pred_region
          %510 = dma.done [#allocation14], 3072
        $region96: #{tpu_custom_call.1} parent=67 // pred_fallthru
          _
        // Predicated region
        $region97: #{tpu_custom_call.1} parent=67 // pred_check
          %p511 = pneg %p246
        $region98: #{tpu_custom_call.1} parent=67 // pred_check_branch
          %513 = sbr.rel (%p511) target = $region100
        $region99: #{tpu_custom_call.1} parent=67 // pred_region
          %514 = dma.done [#allocation17], 3072
        $region100: #{tpu_custom_call.1} parent=67 // pred_fallthru
          _
        %s515 = sand.u32 %s44, 1
        %s516 = scalar_lea.sflag [#allocation5], %s515
        %s517 = sand.u32 %s44, 1
        %s518 = scalar_lea.vmem [#allocation4], %s517
        %p519 = pneg %p57
        %p520 = pneg %p54
        %p521 = pneg %p78
        %p522 = pneg %p75
        %p523 = pneg %p99
        %p524 = pneg %p96
        %p525 = pneg %p120
        %p526 = pneg %p117
        %p527 = pneg %p141
        %p528 = pneg %p138
        %p529 = pneg %p162
        %p530 = pneg %p159
        %p531 = pneg %p183
        %p532 = pneg %p180
        %p533 = pneg %p204
        %p534 = pneg %p201
        %p535 = pneg %p225
        %p536 = pneg %p222
        %p537 = pneg %p246
        %p538 = pneg %p243
        %p539 = pneg %p267
        %p540 = pneg %p264
        %p541 = pneg %p288
        %p542 = pneg %p285
        %p543 = pneg %p314
        %p544 = pneg %p311
        %s545 = sand.u32 %s301, 1
        %s546 = scalar_lea.sflag [#allocation6], %s545
        %s547 = sand.u32 %s301, 1
        %s548 = smul.addr %s547, 3
        %s549 = scalar_lea.vmem [#allocation18], %s548
        %p550 = pneg %p335
        %p551 = pneg %p332
        %p553 = scmp.eq.s32.totalorder %s36, 0
        // Predicated region
        $region101: #{tpu_custom_call.1} parent=67 // pred_check
          %p554 = pneg %p553
        $region102: #{tpu_custom_call.1} parent=67 // pred_check_branch
          %556 = sbr.rel (%p554) target = $region104
        $region103: #{tpu_custom_call.1} parent=67 // pred_region
          %v557 = vld [vmem:[#allocation9] sm:$0x3]
          %558 = vst [vmem:[#allocation2] sm:$0x3] %v557
          %v559 = vld [vmem:[#allocation7] sm:$0xf]
          %v560 = vld [vmem:[#allocation7 + $0x4] sm:$0xf]
          %v561 = vld [vmem:[#allocation12] sm:$0xf]
          %v562 = vld [vmem:[#allocation12 + $0x4] sm:$0xf]
          %v563 = vld [vmem:[#allocation12 + $0x8] sm:$0xf]
          %v564 = vld [vmem:[#allocation12 + $0xc] sm:$0xf]
          %v565 = vld [vmem:[#allocation12 + $0x10] sm:$0xf]
          %v566 = vld [vmem:[#allocation12 + $0x14] sm:$0xf]
          %v567 = vld [vmem:[#allocation12 + $0x18] sm:$0xf]
          %v568 = vld [vmem:[#allocation12 + $0x1c] sm:$0xf]
          %v569 = vld [vmem:[#allocation12 + $0x20] sm:$0xf]
          %v570 = vld [vmem:[#allocation12 + $0x24] sm:$0xf]
          %v571 = vld [vmem:[#allocation12 + $0x28] sm:$0xf]
          %v572 = vld [vmem:[#allocation12 + $0x2c] sm:$0xf]
          %v573 = vld [vmem:[#allocation12 + $0x30] sm:$0xf]
          %v574 = vld [vmem:[#allocation12 + $0x34] sm:$0xf]
          %v575 = vld [vmem:[#allocation12 + $0x38] sm:$0xf]
          %v576 = vld [vmem:[#allocation12 + $0x3c] sm:$0xf]
          %v579 = vunpack.c.l.b16 %v559
          %v580 = vunpack.c.l.b16 %v560
          %v581 = vpack.c.b16 %v580, %v579
          %v599 = vunpack.c.l.b16 %v561
          %v600 = vunpack.c.l.b16 %v562
          %v601 = vunpack.c.l.b16 %v563
          %v602 = vunpack.c.l.b16 %v564
          %v603 = vunpack.c.l.b16 %v565
          %v604 = vunpack.c.l.b16 %v566
          %v605 = vunpack.c.l.b16 %v567
          %v606 = vunpack.c.l.b16 %v568
          %v607 = vunpack.c.l.b16 %v569
          %v608 = vunpack.c.l.b16 %v570
          %v609 = vunpack.c.l.b16 %v571
          %v610 = vunpack.c.l.b16 %v572
          %v611 = vunpack.c.l.b16 %v573
          %v612 = vunpack.c.l.b16 %v574
          %v613 = vunpack.c.l.b16 %v575
          %v614 = vunpack.c.l.b16 %v576
          %v615 = vpack.c.b16 %v600, %v599
          %v616 = vpack.c.b16 %v602, %v601
          %v617 = vpack.c.b16 %v604, %v603
          %v618 = vpack.c.b16 %v606, %v605
          %v619 = vpack.c.b16 %v608, %v607
          %v620 = vpack.c.b16 %v610, %v609
          %v621 = vpack.c.b16 %v612, %v611
          %v622 = vpack.c.b16 %v614, %v613
          %631 = vmatprep.subr.bf16.mxu0 0
          %632 = vmatpush1.bf16.msra.mxu0 %v622
          %633 = vmatprep.subr.bf16.mxu0 0
          %634 = vmatpush1.bf16.msra.mxu0 %v621
          %635 = vmatprep.subr.bf16.mxu0 0
          %636 = vmatpush1.bf16.msra.mxu0 %v620
          %637 = vmatprep.subr.bf16.mxu0 0
          %638 = vmatpush1.bf16.msra.mxu0 %v619
          %639 = vmatprep.subr.bf16.mxu0 0
          %640 = vmatpush1.bf16.msra.mxu0 %v618
          %641 = vmatprep.subr.bf16.mxu0 0
          %642 = vmatpush1.bf16.msra.mxu0 %v617
          %643 = vmatprep.subr.bf16.mxu0 0
          %644 = vmatpush1.bf16.msra.mxu0 %v616
          %645 = vmatprep.subr.bf16.mxu0 0
          %646 = vmatpush1.bf16.msra.mxu0 %v615
          %647 = vmatprep.subr.bf16.mxu0 0
          %648 = vmatpush2.bf16.msra.mxu0 0
          %649 = vmatprep.subr.bf16.mxu0 0
          %650 = vmatpush2.bf16.msra.mxu0 0
          %651 = vmatprep.subr.bf16.mxu0 0
          %652 = vmatpush2.bf16.msra.mxu0 0
          %653 = vmatprep.subr.bf16.mxu0 0
          %654 = vmatpush2.bf16.msra.mxu0 0
          %655 = vmatprep.subr.bf16.mxu0 0
          %656 = vmatpush2.bf16.msra.mxu0 0
          %657 = vmatprep.subr.bf16.mxu0 0
          %658 = vmatpush2.bf16.msra.mxu0 0
          %659 = vmatprep.subr.bf16.mxu0 0
          %660 = vmatpush2.bf16.msra.mxu0 0
          %661 = vmatprep.subr.bf16.mxu0 0
          %662 = vmatpush2.bf16.msra.mxu0 0
          %663 = vmatprep.mubr.bf16.mxu0 0
          %664 = vmatmul.mubr.bf16.gmra.mxu0 %v581
          %v665 = vpop.f32.mrf.mxu0
          %v666 = vadd.f32 0.0, %v665
          %v667 = vpop.f32.mrf.mxu0
          %v668 = vpop.f32.mrf.mxu0
          %v669 = vadd.f32 0.0, %v668
          %v670 = vpop.f32.mrf.mxu0
          %671 = vdwg.mxu0
          %v672 = vld [vmem:[%s5] sm:$0x1]
          %v674 = vlaneseq
          %v675 = vshrl.u32 %v674, 7
          %v676 = vsub.s32 0, %v675
          %v677 = vrot.slane %v672, %v676
          %v679 = vadd.f32 %v666, %v677
          %v680 = vadd.f32 %v669, %v677
          %681 = vst [vmem:[#allocation3] sm:$0xff] %v679
          %682 = vst [vmem:[#allocation3 + $0x8] sm:$0xff] %v680
        $region104: #{tpu_custom_call.1} parent=67 // pred_fallthru
          _
        %v683 = vld [vmem:[#allocation2] sm:$0x3]
        %v684 = vpack.c.bf16 %v683, %v683
        %v685 = vld [vmem:[%s482] sm:$0x1]
        %v686 = vld [vmem:[#allocation7] sm:$0xf]
        %v687 = vld [vmem:[#allocation7 + $0x4] sm:$0xf]
        %v688 = vld [vmem:[#allocation10] sm:$0xf]
        %v689 = vld [vmem:[#allocation10 + $0x4] sm:$0xf]
        %v690 = vld [vmem:[#allocation10 + $0x8] sm:$0xf]
        %v691 = vld [vmem:[#allocation10 + $0xc] sm:$0xf]
        %v692 = vld [vmem:[#allocation10 + $0x10] sm:$0xf]
        %v693 = vld [vmem:[#allocation10 + $0x14] sm:$0xf]
        %v694 = vld [vmem:[#allocation10 + $0x18] sm:$0xf]
        %v695 = vld [vmem:[#allocation10 + $0x1c] sm:$0xf]
        %v696 = vld [vmem:[#allocation10 + $0x20] sm:$0xf]
        %v697 = vld [vmem:[#allocation10 + $0x24] sm:$0xf]
        %v698 = vld [vmem:[#allocation10 + $0x28] sm:$0xf]
        %v699 = vld [vmem:[#allocation10 + $0x2c] sm:$0xf]
        %v700 = vld [vmem:[#allocation10 + $0x30] sm:$0xf]
        %v701 = vld [vmem:[#allocation10 + $0x34] sm:$0xf]
        %v702 = vld [vmem:[#allocation10 + $0x38] sm:$0xf]
        %v703 = vld [vmem:[#allocation10 + $0x3c] sm:$0xf]
        %v720 = vunpack.c.l.b16 %v688
        %v721 = vunpack.c.l.b16 %v689
        %v722 = vunpack.c.l.b16 %v690
        %v723 = vunpack.c.l.b16 %v691
        %v724 = vunpack.c.l.b16 %v692
        %v725 = vunpack.c.l.b16 %v693
        %v726 = vunpack.c.l.b16 %v694
        %v727 = vunpack.c.l.b16 %v695
        %v728 = vunpack.c.l.b16 %v696
        %v729 = vunpack.c.l.b16 %v697
        %v730 = vunpack.c.l.b16 %v698
        %v731 = vunpack.c.l.b16 %v699
        %v732 = vunpack.c.l.b16 %v700
        %v733 = vunpack.c.l.b16 %v701
        %v734 = vunpack.c.l.b16 %v702
        %v735 = vunpack.c.l.b16 %v703
        %v736 = vpack.c.b16 %v721, %v720
        %v737 = vpack.c.b16 %v723, %v722
        %v738 = vpack.c.b16 %v725, %v724
        %v739 = vpack.c.b16 %v727, %v726
        %v740 = vpack.c.b16 %v729, %v728
        %v741 = vpack.c.b16 %v731, %v730
        %v742 = vpack.c.b16 %v733, %v732
        %v743 = vpack.c.b16 %v735, %v734
        %752 = vmatprep.subr.bf16.mxu0 0
        %753 = vmatpush1.bf16.msra.mxu0 %v743
        %754 = vmatprep.subr.bf16.mxu0 0
        %755 = vmatpush1.bf16.msra.mxu0 %v742
        %756 = vmatprep.subr.bf16.mxu0 0
        %757 = vmatpush1.bf16.msra.mxu0 %v741
        %758 = vmatprep.subr.bf16.mxu0 0
        %759 = vmatpush1.bf16.msra.mxu0 %v740
        %760 = vmatprep.subr.bf16.mxu0 0
        %761 = vmatpush1.bf16.msra.mxu0 %v739
        %762 = vmatprep.subr.bf16.mxu0 0
        %763 = vmatpush1.bf16.msra.mxu0 %v738
        %764 = vmatprep.subr.bf16.mxu0 0
        %765 = vmatpush1.bf16.msra.mxu0 %v737
        %766 = vmatprep.subr.bf16.mxu0 0
        %767 = vmatpush1.bf16.msra.mxu0 %v736
        %768 = vmatprep.subr.bf16.mxu0 0
        %769 = vmatpush2.bf16.msra.mxu0 0
        %770 = vmatprep.subr.bf16.mxu0 0
        %771 = vmatpush2.bf16.msra.mxu0 0
        %772 = vmatprep.subr.bf16.mxu0 0
        %773 = vmatpush2.bf16.msra.mxu0 0
        %774 = vmatprep.subr.bf16.mxu0 0
        %775 = vmatpush2.bf16.msra.mxu0 0
        %776 = vmatprep.subr.bf16.mxu0 0
        %777 = vmatpush2.bf16.msra.mxu0 0
        %778 = vmatprep.subr.bf16.mxu0 0
        %779 = vmatpush2.bf16.msra.mxu0 0
        %780 = vmatprep.subr.bf16.mxu0 0
        %781 = vmatpush2.bf16.msra.mxu0 0
        %782 = vmatprep.subr.bf16.mxu0 0
        %783 = vmatpush2.bf16.msra.mxu0 0
        %784 = vmatprep.mubr.bf16.mxu0 0
        %785 = vmatmul.mubr.bf16.gmra.mxu0 %v684
        %v786 = vpop.f32.mrf.mxu0
        %v787 = vadd.f32 0.0, %v786
        %v788 = vpop.f32.mrf.mxu0
        %v789 = vpop.f32.mrf.mxu0
        %v790 = vpop.f32.mrf.mxu0
        %791 = vdwg.mxu0
        %v792 = vld [vmem:[#allocation3] sm:$0xff]
        %v793 = vld [vmem:[#allocation3 + $0x8] sm:$0xff]
        %v796 = vunpack.c.l.s4 1966171168
        %v797 = vunpack.c.0.s8 %v796
        %v798 = vlaneseq
        %v799 = vshrl.u32 %v798, 7
        %v800 = vsub.s32 %v797, %v799
        %v801 = vrot.slane %v787, %v800
        %v802 = vcombine.high %v801, %v801
        %v804 = vunpack.c.l.s4 1966171168
        %v805 = vunpack.c.0.s8 %v804
        %v806 = vlaneseq
        %v807 = vshrl.u32 %v806, 7
        %v808 = vsub.s32 %v805, %v807
        %v809 = vrot.slane %v801, %v808
        %v811 = vunpack.c.l.s4 1966171168
        %v812 = vunpack.c.0.s8 %v811
        %v813 = vlaneseq
        %v814 = vshrl.u32 %v813, 7
        %v815 = vsub.s32 %v812, %v814
        %v816 = vrot.slane %v802, %v815
        %v817 = vlaneseq
        %v818 = vshrl.u32 %v817, 7
        %v819 = vsub.s32 0, %v818
        %v820 = vrot.slane %v809, %v819
        %v821 = vlaneseq
        %v822 = vshrl.u32 %v821, 7
        %v823 = vsub.s32 0, %v822
        %v824 = vrot.slane %v816, %v823
        %v827 = vadd.f32 %v792, %v820
        %v828 = vadd.f32 %v793, %v824
        %v829 = vtanh.pop %v827
        %v830 = vtanh.pop %v828
        %v831 = vld [vmem:[%s6] sm:$0x1]
        %v833 = vlaneseq
        %v834 = vshrl.u32 %v833, 7
        %v835 = vsub.s32 0, %v834
        %v836 = vrot.slane %v831, %v835
        %v838 = vmul.f32 %v829, %v836
        %v839 = vmul.f32 %v830, %v836
        %840 = vadd.xlane.f32.xlu0 %v838
        %v841 = vpop.xlane.xlu0 %840
        %842 = vadd.xlane.f32.xlu0 %v839
        %v843 = vpop.xlane.xlu0 %842
        %v846 = vlaneseq
        %v847 = vand.u32 %v846, 127
        %v848 = vlaneseq
        %v849 = vshrl.u32 %v848, 7
        %v850 = vsub.s32 %v847, %v849
        %v851 = vrot.slane %v841, %v850
        %v852 = vlaneseq
        %v853 = vshrl.u32 %v852, 7
        %v854 = vsub.s32 %v847, %v853
        %v855 = vrot.slane %v843, %v854
        %vm856 = vcmask 1041409
        %v857 = vsel %vm856, %v855, %v851
        %vm859 = vcmask 58368
        %v860 = vsel %vm859, %v857, -inf
        %861 = vmax.xlane.f32.xlu0 %v860
        %v862 = vpop.xlane.xlu0 %861
        %v864 = vlaneseq
        %v865 = vshrl.u32 %v864, 7
        %v866 = vsub.s32 0, %v865
        %v867 = vrot.slane %v862, %v866
        %v868 = vlaneseq
        %v869 = vshrl.u32 %v868, 7
        %v870 = vsub.s32 1, %v869
        %v871 = vrot.slane %v862, %v870
        %v874 = vsub.f32 %v841, %v867
        %v875 = vsub.f32 %v843, %v871
        %v876 = vmul.f32 %v874, 1.442695
        %v877 = vpow.pop %v876
        %v878 = vmul.f32 %v875, 1.442695
        %v879 = vpow.pop %v878
        %882 = vset.pattern.permute.xlu0 0
        %883 = vperm.xlu0 %882, %v877
        %v884 = vpop.permute.xlu0 %883
        %885 = vset.pattern.permute.xlu0 0
        %886 = vperm.xlu0 %885, %v879
        %v887 = vpop.permute.xlu0 %886
        %v888 = vlaneseq
        %v889 = vshrl.u32 %v888, 7
        %v890 = vsub.s32 %v847, %v889
        %v891 = vrot.slane %v884, %v890
        %v892 = vlaneseq
        %v893 = vshrl.u32 %v892, 7
        %v894 = vsub.s32 %v847, %v893
        %v895 = vrot.slane %v887, %v894
        %v896 = vsel %vm856, %v895, %v891
        %v898 = vsel %vm859, %v896, 0.0
        %899 = vadd.xlane.f32.xlu0 %v898
        %v900 = vpop.xlane.xlu0 %899
        %v901 = vrcp.pop %v900
        %v903 = vlaneseq
        %v904 = vshrl.u32 %v903, 7
        %v905 = vsub.s32 0, %v904
        %v906 = vrot.slane %v901, %v905
        %v907 = vlaneseq
        %v908 = vshrl.u32 %v907, 7
        %v909 = vsub.s32 1, %v908
        %v910 = vrot.slane %v901, %v909
        %v913 = vmul.f32 %v877, %v906
        %v914 = vmul.f32 %v879, %v910
        %v915 = vpack.c.bf16 %v913, %v913
        %v916 = vpack.c.bf16 %v914, %v914
        %v918 = vunpack.c.l.b16 %v915
        %919 = vset.pattern.permute.xlu0 0
        %920 = vperm.xlu0 %919, %v918
        %v921 = vpop.permute.xlu0 %920
        %v922 = vlaneseq
        %v923 = vshrl.u32 %v922, 7
        %v924 = vsub.s32 %v847, %v923
        %v925 = vrot.slane %v921, %v924
        %v926 = vpack.c.b16 %v925, %v925
        %vm927 = vcmask 64512
        %v929 = vsel %vm927, %v926, 0
        %vm931 = vcmask 1043456
        %v933 = vsel %vm931, %v686, 0
        %935 = vmatprep.subr.bf16.mxu0 0
        %936 = vmatpush1.bf16.msra.mxu0 0
        %937 = vmatprep.subr.bf16.mxu0 0
        %938 = vmatpush1.bf16.msra.mxu0 0
        %939 = vmatprep.subr.bf16.mxu0 0
        %940 = vmatpush1.bf16.msra.mxu0 0
        %941 = vmatprep.subr.bf16.mxu0 0
        %942 = vmatpush1.bf16.msra.mxu0 0
        %943 = vmatprep.subr.bf16.mxu0 0
        %944 = vmatpush1.bf16.msra.mxu0 0
        %945 = vmatprep.subr.bf16.mxu0 0
        %946 = vmatpush1.bf16.msra.mxu0 0
        %947 = vmatprep.subr.bf16.mxu0 0
        %948 = vmatpush1.bf16.msra.mxu0 0
        %949 = vmatprep.subr.bf16.mxu0 0
        %950 = vmatpush1.bf16.msra.mxu0 %v933
        %951 = vmatprep.subr.bf16.mxu0 0
        %952 = vmatpush2.bf16.msra.mxu0 0
        %953 = vmatprep.subr.bf16.mxu0 0
        %954 = vmatpush2.bf16.msra.mxu0 0
        %955 = vmatprep.subr.bf16.mxu0 0
        %956 = vmatpush2.bf16.msra.mxu0 0
        %957 = vmatprep.subr.bf16.mxu0 0
        %958 = vmatpush2.bf16.msra.mxu0 0
        %959 = vmatprep.subr.bf16.mxu0 0
        %960 = vmatpush2.bf16.msra.mxu0 0
        %961 = vmatprep.subr.bf16.mxu0 0
        %962 = vmatpush2.bf16.msra.mxu0 0
        %963 = vmatprep.subr.bf16.mxu0 0
        %964 = vmatpush2.bf16.msra.mxu0 0
        %965 = vmatprep.subr.bf16.mxu0 0
        %966 = vmatpush2.bf16.msra.mxu0 0
        %967 = vmatprep.mubr.bf16.mxu0 0
        %968 = vmatmul.mubr.bf16.gmra.mxu0 %v929
        %v969 = vpop.f32.mrf.mxu0
        %v970 = vadd.f32 0.0, %v969
        %v971 = vpop.f32.mrf.mxu0
        %v972 = vpop.f32.mrf.mxu0
        %v973 = vpop.f32.mrf.mxu0
        %974 = vdwg.mxu0
        %v976 = vunpack.c.l.b16 %v916
        %977 = vset.pattern.permute.xlu0 0
        %978 = vperm.xlu0 %977, %v976
        %v979 = vpop.permute.xlu0 %978
        %v980 = vlaneseq
        %v981 = vshrl.u32 %v980, 7
        %v982 = vsub.s32 %v847, %v981
        %v983 = vrot.slane %v979, %v982
        %v984 = vpack.c.b16 %v983, %v983
        %v986 = vsel %vm927, %v984, 0
        %v989 = vsel %vm931, %v687, 0
        %991 = vmatprep.subr.bf16.mxu0 0
        %992 = vmatpush1.bf16.msra.mxu0 0
        %993 = vmatprep.subr.bf16.mxu0 0
        %994 = vmatpush1.bf16.msra.mxu0 0
        %995 = vmatprep.subr.bf16.mxu0 0
        %996 = vmatpush1.bf16.msra.mxu0 0
        %997 = vmatprep.subr.bf16.mxu0 0
        %998 = vmatpush1.bf16.msra.mxu0 0
        %999 = vmatprep.subr.bf16.mxu0 0
        %1000 = vmatpush1.bf16.msra.mxu0 0
        %1001 = vmatprep.subr.bf16.mxu0 0
        %1002 = vmatpush1.bf16.msra.mxu0 0
        %1003 = vmatprep.subr.bf16.mxu0 0
        %1004 = vmatpush1.bf16.msra.mxu0 0
        %1005 = vmatprep.subr.bf16.mxu0 0
        %1006 = vmatpush1.bf16.msra.mxu0 %v989
        %1007 = vmatprep.subr.bf16.mxu0 0
        %1008 = vmatpush2.bf16.msra.mxu0 0
        %1009 = vmatprep.subr.bf16.mxu0 0
        %1010 = vmatpush2.bf16.msra.mxu0 0
        %1011 = vmatprep.subr.bf16.mxu0 0
        %1012 = vmatpush2.bf16.msra.mxu0 0
        %1013 = vmatprep.subr.bf16.mxu0 0
        %1014 = vmatpush2.bf16.msra.mxu0 0
        %1015 = vmatprep.subr.bf16.mxu0 0
        %1016 = vmatpush2.bf16.msra.mxu0 0
        %1017 = vmatprep.subr.bf16.mxu0 0
        %1018 = vmatpush2.bf16.msra.mxu0 0
        %1019 = vmatprep.subr.bf16.mxu0 0
        %1020 = vmatpush2.bf16.msra.mxu0 0
        %1021 = vmatprep.subr.bf16.mxu0 0
        %1022 = vmatpush2.bf16.msra.mxu0 0
        %1023 = vmatprep.mubr.bf16.mxu0 0
        %1024 = vmatmul.mubr.bf16.gmra.mxu0 %v986
        %v1025 = vpop.f32.mrf.mxu0
        %v1026 = vadd.f32 0.0, %v1025
        %v1027 = vpop.f32.mrf.mxu0
        %v1028 = vpop.f32.mrf.mxu0
        %v1029 = vpop.f32.mrf.mxu0
        %1030 = vdwg.mxu0
        %v1031 = vpack.c.bf16 %v970, %v970
        %v1032 = vpack.c.bf16 %v1026, %v1026
        %v1033 = vld [vmem:[#allocation13] sm:$0xff]
        %v1034 = vld [vmem:[#allocation13 + $0x8] sm:$0xf]
        %v1035 = vld [vmem:[#allocation13 + $0xc] sm:$0xff]
        %v1036 = vld [vmem:[#allocation13 + $0x14] sm:$0xf]
        %v1037 = vld [vmem:[#allocation13 + $0x18] sm:$0xff]
        %v1038 = vld [vmem:[#allocation13 + $0x20] sm:$0xf]
        %v1039 = vld [vmem:[#allocation13 + $0x24] sm:$0xff]
        %v1040 = vld [vmem:[#allocation13 + $0x2c] sm:$0xf]
        %v1041 = vld [vmem:[#allocation13 + $0x30] sm:$0xff]
        %v1042 = vld [vmem:[#allocation13 + $0x38] sm:$0xf]
        %v1043 = vld [vmem:[#allocation13 + $0x3c] sm:$0xff]
        %v1044 = vld [vmem:[#allocation13 + $0x44] sm:$0xf]
        %v1045 = vld [vmem:[#allocation13 + $0x48] sm:$0xff]
        %v1046 = vld [vmem:[#allocation13 + $0x50] sm:$0xf]
        %v1047 = vld [vmem:[#allocation13 + $0x54] sm:$0xff]
        %v1048 = vld [vmem:[#allocation13 + $0x5c] sm:$0xf]
        %v1049 = vld [vmem:[#allocation13 + $0x60] sm:$0xff]
        %v1050 = vld [vmem:[#allocation13 + $0x68] sm:$0xf]
        %v1051 = vld [vmem:[#allocation13 + $0x6c] sm:$0xff]
        %v1052 = vld [vmem:[#allocation13 + $0x74] sm:$0xf]
        %v1053 = vld [vmem:[#allocation13 + $0x78] sm:$0xff]
        %v1054 = vld [vmem:[#allocation13 + $0x80] sm:$0xf]
        %v1055 = vld [vmem:[#allocation13 + $0x84] sm:$0xff]
        %v1056 = vld [vmem:[#allocation13 + $0x8c] sm:$0xf]
        %v1057 = vld [vmem:[#allocation13 + $0x90] sm:$0xff]
        %v1058 = vld [vmem:[#allocation13 + $0x98] sm:$0xf]
        %v1059 = vld [vmem:[#allocation13 + $0x9c] sm:$0xff]
        %v1060 = vld [vmem:[#allocation13 + $0xa4] sm:$0xf]
        %v1061 = vld [vmem:[#allocation13 + $0xa8] sm:$0xff]
        %v1062 = vld [vmem:[#allocation13 + $0xb0] sm:$0xf]
        %v1063 = vld [vmem:[#allocation13 + $0xb4] sm:$0xff]
        %v1064 = vld [vmem:[#allocation13 + $0xbc] sm:$0xf]
        %v1065 = vld [vmem:[#allocation15] sm:$0xff]
        %v1066 = vld [vmem:[#allocation15 + $0x8] sm:$0xf]
        %v1067 = vld [vmem:[#allocation15 + $0xc] sm:$0xff]
        %v1068 = vld [vmem:[#allocation15 + $0x14] sm:$0xf]
        %v1069 = vld [vmem:[#allocation15 + $0x18] sm:$0xff]
        %v1070 = vld [vmem:[#allocation15 + $0x20] sm:$0xf]
        %v1071 = vld [vmem:[#allocation15 + $0x24] sm:$0xff]
        %v1072 = vld [vmem:[#allocation15 + $0x2c] sm:$0xf]
        %v1073 = vld [vmem:[#allocation15 + $0x30] sm:$0xff]
        %v1074 = vld [vmem:[#allocation15 + $0x38] sm:$0xf]
        %v1075 = vld [vmem:[#allocation15 + $0x3c] sm:$0xff]
        %v1076 = vld [vmem:[#allocation15 + $0x44] sm:$0xf]
        %v1077 = vld [vmem:[#allocation15 + $0x48] sm:$0xff]
        %v1078 = vld [vmem:[#allocation15 + $0x50] sm:$0xf]
        %v1079 = vld [vmem:[#allocation15 + $0x54] sm:$0xff]
        %v1080 = vld [vmem:[#allocation15 + $0x5c] sm:$0xf]
        %v1081 = vld [vmem:[#allocation15 + $0x60] sm:$0xff]
        %v1082 = vld [vmem:[#allocation15 + $0x68] sm:$0xf]
        %v1083 = vld [vmem:[#allocation15 + $0x6c] sm:$0xff]
        %v1084 = vld [vmem:[#allocation15 + $0x74] sm:$0xf]
        %v1085 = vld [vmem:[#allocation15 + $0x78] sm:$0xff]
        %v1086 = vld [vmem:[#allocation15 + $0x80] sm:$0xf]
        %v1087 = vld [vmem:[#allocation15 + $0x84] sm:$0xff]
        %v1088 = vld [vmem:[#allocation15 + $0x8c] sm:$0xf]
        %v1089 = vld [vmem:[#allocation15 + $0x90] sm:$0xff]
        %v1090 = vld [vmem:[#allocation15 + $0x98] sm:$0xf]
        %v1091 = vld [vmem:[#allocation15 + $0x9c] sm:$0xff]
        %v1092 = vld [vmem:[#allocation15 + $0xa4] sm:$0xf]
        %v1093 = vld [vmem:[#allocation15 + $0xa8] sm:$0xff]
        %v1094 = vld [vmem:[#allocation15 + $0xb0] sm:$0xf]
        %v1095 = vld [vmem:[#allocation15 + $0xb4] sm:$0xff]
        %v1096 = vld [vmem:[#allocation15 + $0xbc] sm:$0xf]
        %v1099 = vunpack.c.l.b16 %v1031
        %v1100 = vunpack.c.l.b16 %v1032
        %v1101 = vrot.slane %v1100, 7
        %v1102 = vsel %vm856, %v1101, %v1099
        %v1103 = vpack.c.b16 %v1102, %v1102
        %v1137 = vunpack.c.l.b16 %v1065
        %v1138 = vunpack.c.h.b16 %v1065
        %v1139 = vunpack.c.l.b16 %v1066
        %v1140 = vunpack.c.l.b16 %v1067
        %v1141 = vunpack.c.h.b16 %v1067
        %v1142 = vunpack.c.l.b16 %v1068
        %v1143 = vunpack.c.l.b16 %v1069
        %v1144 = vunpack.c.h.b16 %v1069
        %v1145 = vunpack.c.l.b16 %v1070
        %v1146 = vunpack.c.l.b16 %v1071
        %v1147 = vunpack.c.h.b16 %v1071
        %v1148 = vunpack.c.l.b16 %v1072
        %v1149 = vunpack.c.l.b16 %v1073
        %v1150 = vunpack.c.h.b16 %v1073
        %v1151 = vunpack.c.l.b16 %v1074
        %v1152 = vunpack.c.l.b16 %v1075
        %v1153 = vunpack.c.h.b16 %v1075
        %v1154 = vunpack.c.l.b16 %v1076
        %v1155 = vunpack.c.l.b16 %v1077
        %v1156 = vunpack.c.h.b16 %v1077
        %v1157 = vunpack.c.l.b16 %v1078
        %v1158 = vunpack.c.l.b16 %v1079
        %v1159 = vunpack.c.h.b16 %v1079
        %v1160 = vunpack.c.l.b16 %v1080
        %v1161 = vunpack.c.l.b16 %v1081
        %v1162 = vunpack.c.h.b16 %v1081
        %v1163 = vunpack.c.l.b16 %v1082
        %v1164 = vunpack.c.l.b16 %v1083
        %v1165 = vunpack.c.h.b16 %v1083
        %v1166 = vunpack.c.l.b16 %v1084
        %v1167 = vunpack.c.l.b16 %v1085
        %v1168 = vunpack.c.h.b16 %v1085
        %v1169 = vunpack.c.l.b16 %v1086
        %v1170 = vunpack.c.l.b16 %v1087
        %v1171 = vunpack.c.h.b16 %v1087
        %v1172 = vunpack.c.l.b16 %v1088
        %v1173 = vunpack.c.l.b16 %v1089
        %v1174 = vunpack.c.h.b16 %v1089
        %v1175 = vunpack.c.l.b16 %v1090
        %v1176 = vunpack.c.l.b16 %v1091
        %v1177 = vunpack.c.h.b16 %v1091
        %v1178 = vunpack.c.l.b16 %v1092
        %v1179 = vunpack.c.l.b16 %v1093
        %v1180 = vunpack.c.h.b16 %v1093
        %v1181 = vunpack.c.l.b16 %v1094
        %v1182 = vunpack.c.l.b16 %v1095
        %v1183 = vunpack.c.h.b16 %v1095
        %v1184 = vunpack.c.l.b16 %v1096
        %v1185 = vpack.c.b16 %v1140, %v1137
        %v1186 = vpack.c.b16 %v1141, %v1138
        %v1187 = vpack.c.b16 %v1142, %v1139
        %v1188 = vpack.c.b16 %v1146, %v1143
        %v1189 = vpack.c.b16 %v1147, %v1144
        %v1190 = vpack.c.b16 %v1148, %v1145
        %v1191 = vpack.c.b16 %v1152, %v1149
        %v1192 = vpack.c.b16 %v1153, %v1150
        %v1193 = vpack.c.b16 %v1154, %v1151
        %v1194 = vpack.c.b16 %v1158, %v1155
        %v1195 = vpack.c.b16 %v1159, %v1156
        %v1196 = vpack.c.b16 %v1160, %v1157
        %v1197 = vpack.c.b16 %v1164, %v1161
        %v1198 = vpack.c.b16 %v1165, %v1162
        %v1199 = vpack.c.b16 %v1166, %v1163
        %v1200 = vpack.c.b16 %v1170, %v1167
        %v1201 = vpack.c.b16 %v1171, %v1168
        %v1202 = vpack.c.b16 %v1172, %v1169
        %v1203 = vpack.c.b16 %v1176, %v1173
        %v1204 = vpack.c.b16 %v1177, %v1174
        %v1205 = vpack.c.b16 %v1178, %v1175
        %v1206 = vpack.c.b16 %v1182, %v1179
        %v1207 = vpack.c.b16 %v1183, %v1180
        %v1208 = vpack.c.b16 %v1184, %v1181
        %1233 = vmatprep.subr.bf16.mxu0 %v1207
        %1234 = vmatpush1.bf16.msra.mxu0 %v1206
        %1235 = vmatprep.subr.bf16.mxu0 %v1204
        %1236 = vmatpush1.bf16.msra.mxu0 %v1203
        %1237 = vmatprep.subr.bf16.mxu0 %v1201
        %1238 = vmatpush1.bf16.msra.mxu0 %v1200
        %1239 = vmatprep.subr.bf16.mxu0 %v1198
        %1240 = vmatpush1.bf16.msra.mxu0 %v1197
        %1241 = vmatprep.subr.bf16.mxu0 %v1195
        %1242 = vmatpush1.bf16.msra.mxu0 %v1194
        %1243 = vmatprep.subr.bf16.mxu0 %v1192
        %1244 = vmatpush1.bf16.msra.mxu0 %v1191
        %1245 = vmatprep.subr.bf16.mxu0 %v1189
        %1246 = vmatpush1.bf16.msra.mxu0 %v1188
        %1247 = vmatprep.subr.bf16.mxu0 %v1186
        %1248 = vmatpush1.bf16.msra.mxu0 %v1185
        %1249 = vmatprep.subr.bf16.mxu0 0
        %1250 = vmatpush2.bf16.msra.mxu0 0
        %1251 = vmatprep.subr.bf16.mxu0 0
        %1252 = vmatpush2.bf16.msra.mxu0 0
        %1253 = vmatprep.subr.bf16.mxu0 0
        %1254 = vmatpush2.bf16.msra.mxu0 0
        %1255 = vmatprep.subr.bf16.mxu0 0
        %1256 = vmatpush2.bf16.msra.mxu0 0
        %1257 = vmatprep.subr.bf16.mxu0 0
        %1258 = vmatpush2.bf16.msra.mxu0 0
        %1259 = vmatprep.subr.bf16.mxu0 0
        %1260 = vmatpush2.bf16.msra.mxu0 0
        %1261 = vmatprep.subr.bf16.mxu0 0
        %1262 = vmatpush2.bf16.msra.mxu0 0
        %1263 = vmatprep.subr.bf16.mxu0 0
        %1264 = vmatpush2.bf16.msra.mxu0 0
        %1265 = vmatprep.mubr.bf16.mxu0 0
        %1266 = vmatmul.mubr.bf16.gmra.mxu0 %v1103
        %v1267 = vpop.f32.mrf.mxu0
        %v1268 = vadd.f32 0.0, %v1267
        %v1269 = vpop.f32.mrf.mxu0
        %v1270 = vadd.f32 0.0, %v1269
        %v1271 = vpop.f32.mrf.mxu0
        %v1272 = vpop.f32.mrf.mxu0
        %1273 = vdwg.mxu0
        %1274 = vmatprep.subr.bf16.mxu0 0
        %1275 = vmatpush1.bf16.msra.mxu0 %v1208
        %1276 = vmatprep.subr.bf16.mxu0 0
        %1277 = vmatpush1.bf16.msra.mxu0 %v1205
        %1278 = vmatprep.subr.bf16.mxu0 0
        %1279 = vmatpush1.bf16.msra.mxu0 %v1202
        %1280 = vmatprep.subr.bf16.mxu0 0
        %1281 = vmatpush1.bf16.msra.mxu0 %v1199
        %1282 = vmatprep.subr.bf16.mxu0 0
        %1283 = vmatpush1.bf16.msra.mxu0 %v1196
        %1284 = vmatprep.subr.bf16.mxu0 0
        %1285 = vmatpush1.bf16.msra.mxu0 %v1193
        %1286 = vmatprep.subr.bf16.mxu0 0
        %1287 = vmatpush1.bf16.msra.mxu0 %v1190
        %1288 = vmatprep.subr.bf16.mxu0 0
        %1289 = vmatpush1.bf16.msra.mxu0 %v1187
        %1290 = vmatprep.subr.bf16.mxu0 0
        %1291 = vmatpush2.bf16.msra.mxu0 0
        %1292 = vmatprep.subr.bf16.mxu0 0
        %1293 = vmatpush2.bf16.msra.mxu0 0
        %1294 = vmatprep.subr.bf16.mxu0 0
        %1295 = vmatpush2.bf16.msra.mxu0 0
        %1296 = vmatprep.subr.bf16.mxu0 0
        %1297 = vmatpush2.bf16.msra.mxu0 0
        %1298 = vmatprep.subr.bf16.mxu0 0
        %1299 = vmatpush2.bf16.msra.mxu0 0
        %1300 = vmatprep.subr.bf16.mxu0 0
        %1301 = vmatpush2.bf16.msra.mxu0 0
        %1302 = vmatprep.subr.bf16.mxu0 0
        %1303 = vmatpush2.bf16.msra.mxu0 0
        %1304 = vmatprep.subr.bf16.mxu0 0
        %1305 = vmatpush2.bf16.msra.mxu0 0
        %1306 = vmatprep.mubr.bf16.mxu0 0
        %1307 = vmatmul.mubr.bf16.gmra.mxu0 %v1103
        %v1308 = vpop.f32.mrf.mxu0
        %v1309 = vadd.f32 0.0, %v1308
        %v1310 = vpop.f32.mrf.mxu0
        %v1311 = vpop.f32.mrf.mxu0
        %v1312 = vpop.f32.mrf.mxu0
        %1313 = vdwg.mxu0
        %v1346 = vunpack.c.l.b16 %v1033
        %v1347 = vunpack.c.h.b16 %v1033
        %v1348 = vunpack.c.l.b16 %v1034
        %v1349 = vunpack.c.l.b16 %v1035
        %v1350 = vunpack.c.h.b16 %v1035
        %v1351 = vunpack.c.l.b16 %v1036
        %v1352 = vunpack.c.l.b16 %v1037
        %v1353 = vunpack.c.h.b16 %v1037
        %v1354 = vunpack.c.l.b16 %v1038
        %v1355 = vunpack.c.l.b16 %v1039
        %v1356 = vunpack.c.h.b16 %v1039
        %v1357 = vunpack.c.l.b16 %v1040
        %v1358 = vunpack.c.l.b16 %v1041
        %v1359 = vunpack.c.h.b16 %v1041
        %v1360 = vunpack.c.l.b16 %v1042
        %v1361 = vunpack.c.l.b16 %v1043
        %v1362 = vunpack.c.h.b16 %v1043
        %v1363 = vunpack.c.l.b16 %v1044
        %v1364 = vunpack.c.l.b16 %v1045
        %v1365 = vunpack.c.h.b16 %v1045
        %v1366 = vunpack.c.l.b16 %v1046
        %v1367 = vunpack.c.l.b16 %v1047
        %v1368 = vunpack.c.h.b16 %v1047
        %v1369 = vunpack.c.l.b16 %v1048
        %v1370 = vunpack.c.l.b16 %v1049
        %v1371 = vunpack.c.h.b16 %v1049
        %v1372 = vunpack.c.l.b16 %v1050
        %v1373 = vunpack.c.l.b16 %v1051
        %v1374 = vunpack.c.h.b16 %v1051
        %v1375 = vunpack.c.l.b16 %v1052
        %v1376 = vunpack.c.l.b16 %v1053
        %v1377 = vunpack.c.h.b16 %v1053
        %v1378 = vunpack.c.l.b16 %v1054
        %v1379 = vunpack.c.l.b16 %v1055
        %v1380 = vunpack.c.h.b16 %v1055
        %v1381 = vunpack.c.l.b16 %v1056
        %v1382 = vunpack.c.l.b16 %v1057
        %v1383 = vunpack.c.h.b16 %v1057
        %v1384 = vunpack.c.l.b16 %v1058
        %v1385 = vunpack.c.l.b16 %v1059
        %v1386 = vunpack.c.h.b16 %v1059
        %v1387 = vunpack.c.l.b16 %v1060
        %v1388 = vunpack.c.l.b16 %v1061
        %v1389 = vunpack.c.h.b16 %v1061
        %v1390 = vunpack.c.l.b16 %v1062
        %v1391 = vunpack.c.l.b16 %v1063
        %v1392 = vunpack.c.h.b16 %v1063
        %v1393 = vunpack.c.l.b16 %v1064
        %v1394 = vpack.c.b16 %v1349, %v1346
        %v1395 = vpack.c.b16 %v1350, %v1347
        %v1396 = vpack.c.b16 %v1351, %v1348
        %v1397 = vpack.c.b16 %v1355, %v1352
        %v1398 = vpack.c.b16 %v1356, %v1353
        %v1399 = vpack.c.b16 %v1357, %v1354
        %v1400 = vpack.c.b16 %v1361, %v1358
        %v1401 = vpack.c.b16 %v1362, %v1359
        %v1402 = vpack.c.b16 %v1363, %v1360
        %v1403 = vpack.c.b16 %v1367, %v1364
        %v1404 = vpack.c.b16 %v1368, %v1365
        %v1405 = vpack.c.b16 %v1369, %v1366
        %v1406 = vpack.c.b16 %v1373, %v1370
        %v1407 = vpack.c.b16 %v1374, %v1371
        %v1408 = vpack.c.b16 %v1375, %v1372
        %v1409 = vpack.c.b16 %v1379, %v1376
        %v1410 = vpack.c.b16 %v1380, %v1377
        %v1411 = vpack.c.b16 %v1381, %v1378
        %v1412 = vpack.c.b16 %v1385, %v1382
        %v1413 = vpack.c.b16 %v1386, %v1383
        %v1414 = vpack.c.b16 %v1387, %v1384
        %v1415 = vpack.c.b16 %v1391, %v1388
        %v1416 = vpack.c.b16 %v1392, %v1389
        %v1417 = vpack.c.b16 %v1393, %v1390
        %1442 = vmatprep.subr.bf16.mxu0 %v1416
        %1443 = vmatpush1.bf16.msra.mxu0 %v1415
        %1444 = vmatprep.subr.bf16.mxu0 %v1413
        %1445 = vmatpush1.bf16.msra.mxu0 %v1412
        %1446 = vmatprep.subr.bf16.mxu0 %v1410
        %1447 = vmatpush1.bf16.msra.mxu0 %v1409
        %1448 = vmatprep.subr.bf16.mxu0 %v1407
        %1449 = vmatpush1.bf16.msra.mxu0 %v1406
        %1450 = vmatprep.subr.bf16.mxu0 %v1404
        %1451 = vmatpush1.bf16.msra.mxu0 %v1403
        %1452 = vmatprep.subr.bf16.mxu0 %v1401
        %1453 = vmatpush1.bf16.msra.mxu0 %v1400
        %1454 = vmatprep.subr.bf16.mxu0 %v1398
        %1455 = vmatpush1.bf16.msra.mxu0 %v1397
        %1456 = vmatprep.subr.bf16.mxu0 %v1395
        %1457 = vmatpush1.bf16.msra.mxu0 %v1394
        %1458 = vmatprep.subr.bf16.mxu0 0
        %1459 = vmatpush2.bf16.msra.mxu0 0
        %1460 = vmatprep.subr.bf16.mxu0 0
        %1461 = vmatpush2.bf16.msra.mxu0 0
        %1462 = vmatprep.subr.bf16.mxu0 0
        %1463 = vmatpush2.bf16.msra.mxu0 0
        %1464 = vmatprep.subr.bf16.mxu0 0
        %1465 = vmatpush2.bf16.msra.mxu0 0
        %1466 = vmatprep.subr.bf16.mxu0 0
        %1467 = vmatpush2.bf16.msra.mxu0 0
        %1468 = vmatprep.subr.bf16.mxu0 0
        %1469 = vmatpush2.bf16.msra.mxu0 0
        %1470 = vmatprep.subr.bf16.mxu0 0
        %1471 = vmatpush2.bf16.msra.mxu0 0
        %1472 = vmatprep.subr.bf16.mxu0 0
        %1473 = vmatpush2.bf16.msra.mxu0 0
        %1474 = vmatprep.mubr.bf16.mxu0 0
        %1475 = vmatmul.mubr.bf16.gmra.mxu0 %v685
        %v1476 = vpop.f32.mrf.mxu0
        %v1477 = vadd.f32 %v1268, %v1476
        %v1478 = vpop.f32.mrf.mxu0
        %v1479 = vadd.f32 %v1270, %v1478
        %v1480 = vpop.f32.mrf.mxu0
        %v1481 = vpop.f32.mrf.mxu0
        %1482 = vdwg.mxu0
        %1483 = vmatprep.subr.bf16.mxu0 0
        %1484 = vmatpush1.bf16.msra.mxu0 %v1417
        %1485 = vmatprep.subr.bf16.mxu0 0
        %1486 = vmatpush1.bf16.msra.mxu0 %v1414
        %1487 = vmatprep.subr.bf16.mxu0 0
        %1488 = vmatpush1.bf16.msra.mxu0 %v1411
        %1489 = vmatprep.subr.bf16.mxu0 0
        %1490 = vmatpush1.bf16.msra.mxu0 %v1408
        %1491 = vmatprep.subr.bf16.mxu0 0
        %1492 = vmatpush1.bf16.msra.mxu0 %v1405
        %1493 = vmatprep.subr.bf16.mxu0 0
        %1494 = vmatpush1.bf16.msra.mxu0 %v1402
        %1495 = vmatprep.subr.bf16.mxu0 0
        %1496 = vmatpush1.bf16.msra.mxu0 %v1399
        %1497 = vmatprep.subr.bf16.mxu0 0
        %1498 = vmatpush1.bf16.msra.mxu0 %v1396
        %1499 = vmatprep.subr.bf16.mxu0 0
        %1500 = vmatpush2.bf16.msra.mxu0 0
        %1501 = vmatprep.subr.bf16.mxu0 0
        %1502 = vmatpush2.bf16.msra.mxu0 0
        %1503 = vmatprep.subr.bf16.mxu0 0
        %1504 = vmatpush2.bf16.msra.mxu0 0
        %1505 = vmatprep.subr.bf16.mxu0 0
        %1506 = vmatpush2.bf16.msra.mxu0 0
        %1507 = vmatprep.subr.bf16.mxu0 0
        %1508 = vmatpush2.bf16.msra.mxu0 0
        %1509 = vmatprep.subr.bf16.mxu0 0
        %1510 = vmatpush2.bf16.msra.mxu0 0
        %1511 = vmatprep.subr.bf16.mxu0 0
        %1512 = vmatpush2.bf16.msra.mxu0 0
        %1513 = vmatprep.subr.bf16.mxu0 0
        %1514 = vmatpush2.bf16.msra.mxu0 0
        %1515 = vmatprep.mubr.bf16.mxu0 0
        %1516 = vmatmul.mubr.bf16.gmra.mxu0 %v685
        %v1517 = vpop.f32.mrf.mxu0
        %v1518 = vadd.f32 %v1309, %v1517
        %v1519 = vpop.f32.mrf.mxu0
        %v1520 = vpop.f32.mrf.mxu0
        %v1521 = vpop.f32.mrf.mxu0
        %1522 = vdwg.mxu0
        %v1523 = vld [vmem:[%s10] sm:$0x7]
        %v1525 = vlaneseq
        %v1526 = vshrl.u32 %v1525, 7
        %v1527 = vsub.s32 0, %v1526
        %v1528 = vrot.slane %v1523, %v1527
        %v1529 = vlaneseq
        %v1530 = vshrl.u32 %v1529, 7
        %v1531 = vsub.s32 1, %v1530
        %v1532 = vrot.slane %v1523, %v1531
        %v1533 = vlaneseq
        %v1534 = vshrl.u32 %v1533, 7
        %v1535 = vsub.s32 2, %v1534
        %v1536 = vrot.slane %v1523, %v1535
        %v1540 = vadd.f32 %v1477, %v1528
        %v1541 = vadd.f32 %v1479, %v1532
        %v1542 = vadd.f32 %v1518, %v1536
        %v1543 = vld [vmem:[#allocation16] sm:$0xff]
        %v1544 = vld [vmem:[#allocation16 + $0x8] sm:$0xf]
        %v1545 = vld [vmem:[#allocation16 + $0xc] sm:$0xff]
        %v1546 = vld [vmem:[#allocation16 + $0x14] sm:$0xf]
        %v1547 = vld [vmem:[#allocation16 + $0x18] sm:$0xff]
        %v1548 = vld [vmem:[#allocation16 + $0x20] sm:$0xf]
        %v1549 = vld [vmem:[#allocation16 + $0x24] sm:$0xff]
        %v1550 = vld [vmem:[#allocation16 + $0x2c] sm:$0xf]
        %v1551 = vld [vmem:[#allocation16 + $0x30] sm:$0xff]
        %v1552 = vld [vmem:[#allocation16 + $0x38] sm:$0xf]
        %v1553 = vld [vmem:[#allocation16 + $0x3c] sm:$0xff]
        %v1554 = vld [vmem:[#allocation16 + $0x44] sm:$0xf]
        %v1555 = vld [vmem:[#allocation16 + $0x48] sm:$0xff]
        %v1556 = vld [vmem:[#allocation16 + $0x50] sm:$0xf]
        %v1557 = vld [vmem:[#allocation16 + $0x54] sm:$0xff]
        %v1558 = vld [vmem:[#allocation16 + $0x5c] sm:$0xf]
        %v1559 = vld [vmem:[#allocation16 + $0x60] sm:$0xff]
        %v1560 = vld [vmem:[#allocation16 + $0x68] sm:$0xf]
        %v1561 = vld [vmem:[#allocation16 + $0x6c] sm:$0xff]
        %v1562 = vld [vmem:[#allocation16 + $0x74] sm:$0xf]
        %v1563 = vld [vmem:[#allocation16 + $0x78] sm:$0xff]
        %v1564 = vld [vmem:[#allocation16 + $0x80] sm:$0xf]
        %v1565 = vld [vmem:[#allocation16 + $0x84] sm:$0xff]
        %v1566 = vld [vmem:[#allocation16 + $0x8c] sm:$0xf]
        %v1567 = vld [vmem:[#allocation16 + $0x90] sm:$0xff]
        %v1568 = vld [vmem:[#allocation16 + $0x98] sm:$0xf]
        %v1569 = vld [vmem:[#allocation16 + $0x9c] sm:$0xff]
        %v1570 = vld [vmem:[#allocation16 + $0xa4] sm:$0xf]
        %v1571 = vld [vmem:[#allocation16 + $0xa8] sm:$0xff]
        %v1572 = vld [vmem:[#allocation16 + $0xb0] sm:$0xf]
        %v1573 = vld [vmem:[#allocation16 + $0xb4] sm:$0xff]
        %v1574 = vld [vmem:[#allocation16 + $0xbc] sm:$0xf]
        %v1575 = vld [vmem:[%s11] sm:$0x7]
        %v1577 = vlaneseq
        %v1578 = vshrl.u32 %v1577, 7
        %v1579 = vsub.s32 0, %v1578
        %v1580 = vrot.slane %v1575, %v1579
        %v1581 = vlaneseq
        %v1582 = vshrl.u32 %v1581, 7
        %v1583 = vsub.s32 1, %v1582
        %v1584 = vrot.slane %v1575, %v1583
        %v1585 = vlaneseq
        %v1586 = vshrl.u32 %v1585, 7
        %v1587 = vsub.s32 2, %v1586
        %v1588 = vrot.slane %v1575, %v1587
        %v1624 = vunpack.c.l.b16 %v1543
        %v1625 = vunpack.c.h.b16 %v1543
        %v1626 = vunpack.c.l.b16 %v1544
        %v1627 = vunpack.c.l.b16 %v1545
        %v1628 = vunpack.c.h.b16 %v1545
        %v1629 = vunpack.c.l.b16 %v1546
        %v1630 = vunpack.c.l.b16 %v1547
        %v1631 = vunpack.c.h.b16 %v1547
        %v1632 = vunpack.c.l.b16 %v1548
        %v1633 = vunpack.c.l.b16 %v1549
        %v1634 = vunpack.c.h.b16 %v1549
        %v1635 = vunpack.c.l.b16 %v1550
        %v1636 = vunpack.c.l.b16 %v1551
        %v1637 = vunpack.c.h.b16 %v1551
        %v1638 = vunpack.c.l.b16 %v1552
        %v1639 = vunpack.c.l.b16 %v1553
        %v1640 = vunpack.c.h.b16 %v1553
        %v1641 = vunpack.c.l.b16 %v1554
        %v1642 = vunpack.c.l.b16 %v1555
        %v1643 = vunpack.c.h.b16 %v1555
        %v1644 = vunpack.c.l.b16 %v1556
        %v1645 = vunpack.c.l.b16 %v1557
        %v1646 = vunpack.c.h.b16 %v1557
        %v1647 = vunpack.c.l.b16 %v1558
        %v1648 = vunpack.c.l.b16 %v1559
        %v1649 = vunpack.c.h.b16 %v1559
        %v1650 = vunpack.c.l.b16 %v1560
        %v1651 = vunpack.c.l.b16 %v1561
        %v1652 = vunpack.c.h.b16 %v1561
        %v1653 = vunpack.c.l.b16 %v1562
        %v1654 = vunpack.c.l.b16 %v1563
        %v1655 = vunpack.c.h.b16 %v1563
        %v1656 = vunpack.c.l.b16 %v1564
        %v1657 = vunpack.c.l.b16 %v1565
        %v1658 = vunpack.c.h.b16 %v1565
        %v1659 = vunpack.c.l.b16 %v1566
        %v1660 = vunpack.c.l.b16 %v1567
        %v1661 = vunpack.c.h.b16 %v1567
        %v1662 = vunpack.c.l.b16 %v1568
        %v1663 = vunpack.c.l.b16 %v1569
        %v1664 = vunpack.c.h.b16 %v1569
        %v1665 = vunpack.c.l.b16 %v1570
        %v1666 = vunpack.c.l.b16 %v1571
        %v1667 = vunpack.c.h.b16 %v1571
        %v1668 = vunpack.c.l.b16 %v1572
        %v1669 = vunpack.c.l.b16 %v1573
        %v1670 = vunpack.c.h.b16 %v1573
        %v1671 = vunpack.c.l.b16 %v1574
        %v1672 = vpack.c.b16 %v1627, %v1624
        %v1673 = vpack.c.b16 %v1628, %v1625
        %v1674 = vpack.c.b16 %v1629, %v1626
        %v1675 = vpack.c.b16 %v1633, %v1630
        %v1676 = vpack.c.b16 %v1634, %v1631
        %v1677 = vpack.c.b16 %v1635, %v1632
        %v1678 = vpack.c.b16 %v1639, %v1636
        %v1679 = vpack.c.b16 %v1640, %v1637
        %v1680 = vpack.c.b16 %v1641, %v1638
        %v1681 = vpack.c.b16 %v1645, %v1642
        %v1682 = vpack.c.b16 %v1646, %v1643
        %v1683 = vpack.c.b16 %v1647, %v1644
        %v1684 = vpack.c.b16 %v1651, %v1648
        %v1685 = vpack.c.b16 %v1652, %v1649
        %v1686 = vpack.c.b16 %v1653, %v1650
        %v1687 = vpack.c.b16 %v1657, %v1654
        %v1688 = vpack.c.b16 %v1658, %v1655
        %v1689 = vpack.c.b16 %v1659, %v1656
        %v1690 = vpack.c.b16 %v1663, %v1660
        %v1691 = vpack.c.b16 %v1664, %v1661
        %v1692 = vpack.c.b16 %v1665, %v1662
        %v1693 = vpack.c.b16 %v1669, %v1666
        %v1694 = vpack.c.b16 %v1670, %v1667
        %v1695 = vpack.c.b16 %v1671, %v1668
        %1720 = vmatprep.subr.bf16.mxu0 %v1694
        %1721 = vmatpush1.bf16.msra.mxu0 %v1693
        %1722 = vmatprep.subr.bf16.mxu0 %v1691
        %1723 = vmatpush1.bf16.msra.mxu0 %v1690
        %1724 = vmatprep.subr.bf16.mxu0 %v1688
        %1725 = vmatpush1.bf16.msra.mxu0 %v1687
        %1726 = vmatprep.subr.bf16.mxu0 %v1685
        %1727 = vmatpush1.bf16.msra.mxu0 %v1684
        %1728 = vmatprep.subr.bf16.mxu0 %v1682
        %1729 = vmatpush1.bf16.msra.mxu0 %v1681
        %1730 = vmatprep.subr.bf16.mxu0 %v1679
        %1731 = vmatpush1.bf16.msra.mxu0 %v1678
        %1732 = vmatprep.subr.bf16.mxu0 %v1676
        %1733 = vmatpush1.bf16.msra.mxu0 %v1675
        %1734 = vmatprep.subr.bf16.mxu0 %v1673
        %1735 = vmatpush1.bf16.msra.mxu0 %v1672
        %1736 = vmatprep.subr.bf16.mxu0 0
        %1737 = vmatpush2.bf16.msra.mxu0 0
        %1738 = vmatprep.subr.bf16.mxu0 0
        %1739 = vmatpush2.bf16.msra.mxu0 0
        %1740 = vmatprep.subr.bf16.mxu0 0
        %1741 = vmatpush2.bf16.msra.mxu0 0
        %1742 = vmatprep.subr.bf16.mxu0 0
        %1743 = vmatpush2.bf16.msra.mxu0 0
        %1744 = vmatprep.subr.bf16.mxu0 0
        %1745 = vmatpush2.bf16.msra.mxu0 0
        %1746 = vmatprep.subr.bf16.mxu0 0
        %1747 = vmatpush2.bf16.msra.mxu0 0
        %1748 = vmatprep.subr.bf16.mxu0 0
        %1749 = vmatpush2.bf16.msra.mxu0 0
        %1750 = vmatprep.subr.bf16.mxu0 0
        %1751 = vmatpush2.bf16.msra.mxu0 0
        %1752 = vmatprep.mubr.bf16.mxu0 0
        %1753 = vmatmul.mubr.bf16.gmra.mxu0 %v684
        %v1754 = vpop.f32.mrf.mxu0
        %v1755 = vadd.f32 %v1580, %v1754
        %v1756 = vpop.f32.mrf.mxu0
        %v1757 = vadd.f32 %v1584, %v1756
        %v1758 = vpop.f32.mrf.mxu0
        %v1759 = vpop.f32.mrf.mxu0
        %1760 = vdwg.mxu0
        %1761 = vmatprep.subr.bf16.mxu0 0
        %1762 = vmatpush1.bf16.msra.mxu0 %v1695
        %1763 = vmatprep.subr.bf16.mxu0 0
        %1764 = vmatpush1.bf16.msra.mxu0 %v1692
        %1765 = vmatprep.subr.bf16.mxu0 0
        %1766 = vmatpush1.bf16.msra.mxu0 %v1689
        %1767 = vmatprep.subr.bf16.mxu0 0
        %1768 = vmatpush1.bf16.msra.mxu0 %v1686
        %1769 = vmatprep.subr.bf16.mxu0 0
        %1770 = vmatpush1.bf16.msra.mxu0 %v1683
        %1771 = vmatprep.subr.bf16.mxu0 0
        %1772 = vmatpush1.bf16.msra.mxu0 %v1680
        %1773 = vmatprep.subr.bf16.mxu0 0
        %1774 = vmatpush1.bf16.msra.mxu0 %v1677
        %1775 = vmatprep.subr.bf16.mxu0 0
        %1776 = vmatpush1.bf16.msra.mxu0 %v1674
        %1777 = vmatprep.subr.bf16.mxu0 0
        %1778 = vmatpush2.bf16.msra.mxu0 0
        %1779 = vmatprep.subr.bf16.mxu0 0
        %1780 = vmatpush2.bf16.msra.mxu0 0
        %1781 = vmatprep.subr.bf16.mxu0 0
        %1782 = vmatpush2.bf16.msra.mxu0 0
        %1783 = vmatprep.subr.bf16.mxu0 0
        %1784 = vmatpush2.bf16.msra.mxu0 0
        %1785 = vmatprep.subr.bf16.mxu0 0
        %1786 = vmatpush2.bf16.msra.mxu0 0
        %1787 = vmatprep.subr.bf16.mxu0 0
        %1788 = vmatpush2.bf16.msra.mxu0 0
        %1789 = vmatprep.subr.bf16.mxu0 0
        %1790 = vmatpush2.bf16.msra.mxu0 0
        %1791 = vmatprep.subr.bf16.mxu0 0
        %1792 = vmatpush2.bf16.msra.mxu0 0
        %1793 = vmatprep.mubr.bf16.mxu0 0
        %1794 = vmatmul.mubr.bf16.gmra.mxu0 %v684
        %v1795 = vpop.f32.mrf.mxu0
        %v1796 = vadd.f32 %v1588, %v1795
        %v1797 = vpop.f32.mrf.mxu0
        %v1798 = vpop.f32.mrf.mxu0
        %v1799 = vpop.f32.mrf.mxu0
        %1800 = vdwg.mxu0
        %v1801 = vadd.f32 %v1540, %v1755
        %v1802 = vxor.u32 %v1801, 2147483648
        %v1803 = vmul.f32 %v1802, 1.442695
        %v1804 = vpow.pop %v1803
        %v1805 = vadd.f32 %v1804, 1.0
        %v1806 = vrcp.pop %v1805
        %v1807 = vmul.f32 1.0, %v1806
        %v1808 = vadd.f32 %v1541, %v1757
        %v1809 = vxor.u32 %v1808, 2147483648
        %v1810 = vmul.f32 %v1809, 1.442695
        %v1811 = vpow.pop %v1810
        %v1812 = vadd.f32 %v1811, 1.0
        %v1813 = vrcp.pop %v1812
        %v1814 = vmul.f32 1.0, %v1813
        %v1815 = vmul.f32 %v1807, %v1796
        %v1816 = vadd.f32 %v1542, %v1815
        %v1817 = vtanh.pop %v1816
        %v1818 = vsub.f32 1.0, %v1814
        %v1819 = vmul.f32 %v1818, %v1817
        %v1820 = vmul.f32 %v1814, %v683
        %v1821 = vadd.f32 %v1819, %v1820
        %1822 = vst [vmem:[#allocation2] sm:$0x3] %v1821
        %v1823 = vpack.c.bf16 %v1821, %v1821
        %1824 = vst [vmem:[%s549] sm:$0x1] %v1823
        %v1826 = vunpack.c.l.s4 1966171168
        %v1827 = vunpack.c.0.s8 %v1826
        %v1828 = vlaneseq
        %v1829 = vshrl.u32 %v1828, 7
        %v1830 = vsub.s32 %v1827, %v1829
        %v1831 = vrot.slane %v1031, %v1830
        %v1833 = vunpack.c.l.s4 1966171168
        %v1834 = vunpack.c.0.s8 %v1833
        %v1835 = vlaneseq
        %v1836 = vshrl.u32 %v1835, 7
        %v1837 = vsub.s32 %v1834, %v1836
        %v1838 = vrot.slane %v1831, %v1837
        %v1840 = vunpack.c.l.s4 1966171168
        %v1841 = vunpack.c.0.s8 %v1840
        %v1842 = vlaneseq
        %v1843 = vshrl.u32 %v1842, 7
        %v1844 = vsub.s32 %v1841, %v1843
        %v1845 = vrot.slane %v1032, %v1844
        %v1847 = vunpack.c.l.s4 1966171168
        %v1848 = vunpack.c.0.s8 %v1847
        %v1849 = vlaneseq
        %v1850 = vshrl.u32 %v1849, 7
        %v1851 = vsub.s32 %v1848, %v1850
        %v1852 = vrot.slane %v1845, %v1851
        %v1854 = vunpack.c.l.s4 1935823168
        %v1855 = vunpack.c.0.s8 %v1854
        %v1856 = vlaneseq
        %v1857 = vshrl.u32 %v1856, 7
        %v1858 = vsub.s32 %v1855, %v1857
        %v1859 = vrot.slane %v1838, %v1858
        %v1861 = vunpack.c.l.s4 1935823168
        %v1862 = vunpack.c.0.s8 %v1861
        %v1863 = vlaneseq
        %v1864 = vshrl.u32 %v1863, 7
        %v1865 = vsub.s32 %v1862, %v1864
        %v1866 = vrot.slane %v1859, %v1865
        %v1868 = vunpack.c.l.s4 1935823168
        %v1869 = vunpack.c.0.s8 %v1868
        %v1870 = vlaneseq
        %v1871 = vshrl.u32 %v1870, 7
        %v1872 = vsub.s32 %v1869, %v1871
        %v1873 = vrot.slane %v1852, %v1872
        %v1875 = vunpack.c.l.s4 1935823168
        %v1876 = vunpack.c.0.s8 %v1875
        %v1877 = vlaneseq
        %v1878 = vshrl.u32 %v1877, 7
        %v1879 = vsub.s32 %v1876, %v1878
        %v1880 = vrot.slane %v1873, %v1879
        %v1881 = vunpack.c.l.b16 %v1866
        %v1882 = vunpack.c.l.b16 %v1880
        %v1883 = vrot.slane %v1882, 7
        %v1884 = vsel %vm856, %v1883, %v1881
        %v1885 = vpack.c.b16 %v1884, %v1884
        %v1887 = vunpack.c.l.s4 1966171168
        %v1888 = vunpack.c.0.s8 %v1887
        %v1889 = vlaneseq
        %v1890 = vshrl.u32 %v1889, 7
        %v1891 = vsub.s32 %v1888, %v1890
        %v1892 = vrot.slane %v1885, %v1891
        %v1894 = vunpack.c.l.s4 1966171168
        %v1895 = vunpack.c.0.s8 %v1894
        %v1896 = vlaneseq
        %v1897 = vshrl.u32 %v1896, 7
        %v1898 = vsub.s32 %v1895, %v1897
        %v1899 = vrot.slane %v1892, %v1898
        %1901 = vst [vmem:[%s549 + $0x1] sm:$0x1] %v1899
        %1902 = vst [vmem:[%s549 + $0x2] sm:$0x1] %v685
        %p1903 = scmp.eq.s32.totalorder %s36, 3
        // Predicated region
        $region105: #{tpu_custom_call.1} parent=67 // pred_check
          %p1904 = pneg %p1903
        $region106: #{tpu_custom_call.1} parent=67 // pred_check_branch
          %1906 = sbr.rel (%p1904) target = $region108
        $region107: #{tpu_custom_call.1} parent=67 // pred_region
          %1907 = vst [vmem:[#allocation19] sm:$0x3] %v1821
        $region108: #{tpu_custom_call.1} parent=67 // pred_fallthru
          _
        %s1908 = sand.u32 %s301, 1
        %s1909 = scalar_lea.sflag [#allocation6], %s1908
        %s1910 = sand.u32 %s301, 1
        %s1911 = smul.addr %s1910, 3
        %s1912 = scalar_lea.vmem [#allocation18], %s1911
        // Predicated region
        $region109: #{tpu_custom_call.1} parent=67 // pred_check
          %p1913 = pneg %p311
        $region110: #{tpu_custom_call.1} parent=67 // pred_check_branch
          %1915 = sbr.rel (%p1913) target = $region112
        $region111: #{tpu_custom_call.1} parent=67 // pred_region
          %s1917 = ssub.s32 48, 48
          %1918 = vsyncadd %s1909, %s1917
          %s1919 = smul.addr %s36, 3
          %s1920 = smul.addr %s1919, 16
          %s1921 = scalar_lea.hbm %s12, %s1920
          %s1923 = sshll.u32 %s1912, 4
          %s1924 = int_to_ptr.vmem [resolvable:$true] %s1923
          %1926 = dma.vmem_to_hbm [thread:$0]  %s1924, 48, %s1921, %s1909
        $region112: #{tpu_custom_call.1} parent=67 // pred_fallthru
          _
        // Predicated region
        $region113: #{tpu_custom_call.1} parent=67 // pred_check
          %p1927 = pneg %p332
        $region114: #{tpu_custom_call.1} parent=67 // pred_check_branch
          %1929 = sbr.rel (%p1927) target = $region116
        $region115: #{tpu_custom_call.1} parent=67 // pred_region
          %s1931 = ssub.s32 32, 32
          %1932 = vsyncadd [#allocation20], %s1931
          %s1934 = sshll.u32 [#allocation19], 4
          %s1935 = int_to_ptr.vmem [resolvable:$true] %s1934
          %1937 = dma.vmem_to_hbm [thread:$0]  %s1935, 32, %s13, [#allocation20]
        $region116: #{tpu_custom_call.1} parent=67 // pred_fallthru
          _
        // Predicated region
        $region117: #{tpu_custom_call.1} parent=67 // pred_check
          %p1938 = pneg %p332
        $region118: #{tpu_custom_call.1} parent=67 // pred_check_branch
          %1940 = sbr.rel (%p1938) target = $region120
        $region119: #{tpu_custom_call.1} parent=67 // pred_region
          %1941 = dma.done [#allocation20], 32
        $region120: #{tpu_custom_call.1} parent=67 // pred_fallthru
          _
      $region68: #{tpu_custom_call.1} parent=5 // pred_fallthru
        _
      %p1942 = scmp.le.s32.totalorder 2, %s31
      // Predicated region
      $region121: #{tpu_custom_call.1} parent=5 // pred_check
        %p1943 = pneg %p1942
      $region122: #{tpu_custom_call.1} parent=5 // pred_check_branch
        %1945 = sbr.rel (%p1943) target = $region124
      $region123: #{tpu_custom_call.1} parent=5 // pred_region
        %s1946 = ssub.s32 %s31, 2
        // Predicated region
        $region125: #{tpu_custom_call.1} parent=123 // pred_check
          %p1947 = pneg %p317
        $region126: #{tpu_custom_call.1} parent=123 // pred_check_branch
          %1949 = sbr.rel (%p1947) target = $region128
        $region127: #{tpu_custom_call.1} parent=123 // pred_region
          %s1950 = sand.u32 %s302, 1
          %s1951 = scalar_lea.sflag [#allocation6], %s1950
          %s1952 = sand.u32 %s302, 1
          %s1953 = smul.addr %s1952, 3
          %s1954 = scalar_lea.vmem [#allocation18], %s1953
          %1955 = dma.done %s1951, 48
        $region128: #{tpu_custom_call.1} parent=123 // pred_fallthru
          _
      $region124: #{tpu_custom_call.1} parent=5 // pred_fallthru
        _
    $region6: #{tpu_custom_call.1} parent=1 // loop_footer
      %s35 = sadd.s32 1, %s31
    $region7: #{tpu_custom_call.1} parent=1 // loop_footer_branch
      %30 = sbr.rel target = $region3
    $region8: #{tpu_custom_call.1} parent=1 // loop_exit
      _
    %1956 = vsyncpa [#allocation5], 1
    %s1957 = scalar_lea.sflag [#allocation5], 1
    %1958 = vsyncpa %s1957, 1
    %1959 = vsyncpa [#allocation8], 1
    %1960 = vsyncpa [#allocation11], 1
    %1961 = vsyncpa [#allocation14], 1
    %1962 = vsyncpa [#allocation17], 1
    %1963 = vsyncpa [#allocation6], 1
    %s1964 = scalar_lea.sflag [#allocation6], 1
    %1965 = vsyncpa %s1964, 1
    %1966 = vsyncpa [#allocation20], 1

</llo_original>
